<compile_context>
chip_gen: v7x
topology: tpu7x:2x2x1
jax: 0.10.0
libtpu: 0.0.40
codegen_flags: <defaults>
</compile_context>

<pallas_src>
import functools

import jax
import jax.numpy as jnp
from jax import lax
from jax.experimental import pallas as pl
from jax.experimental.pallas import tpu as pltpu


def _round_up(x, m):
    return ((x + m - 1) // m) * m


def fused_head_kernel(x_ref, w_ref, o_ref, m_sc, l_sc, acc_sc):
    """One grid step = one (batch, query-tile).

    x_ref : (T, C)      full sequence of this batch element (same block for all
                        query tiles of a batch -> DMA'd once per batch).
    w_ref : (C, 3*Hp)   packed [Wk | Wq*scale | Wv], head dim zero-padded to a
                        lane-aligned multiple of 128 (constant block -> one DMA).
    o_ref : (tq, H)     output rows for this query tile (written directly,
                        no padded output + post-hoc slice).
    m/l/acc scratch     f32 online-softmax state, re-initialized per grid step.
    """
    tq, h = o_ref.shape
    hp = acc_sc.shape[-1]
    tk = tq
    qi = pl.program_id(1)
    dt = x_ref.dtype

    # Online-softmax state init (per kernel invocation).
    m_sc[...] = jnp.full_like(m_sc, -jnp.inf)
    l_sc[...] = jnp.zeros_like(l_sc)
    acc_sc[...] = jnp.zeros_like(acc_sc)

    # Q projection for this query tile (1/sqrt(H) already folded into W_q).
    q_start = pl.multiple_of(qi * tq, tq)
    xq = x_ref[pl.ds(q_start, tq), :]                          # (tq, C)
    q = jnp.dot(xq, w_ref[:, hp:2 * hp],
                preferred_element_type=jnp.float32).astype(dt)  # (tq, Hp)

    # Causal KV loop: dynamic trip count -> tiles above the diagonal are never
    # projected nor multiplied (tk == tq so the bound is simply qi + 1).
    @pl.loop(0, qi + 1)
    def _(j):
        k_start = pl.multiple_of(j * tk, tk)
        xk = x_ref[pl.ds(k_start, tk), :]                       # (tk, C)
        # Separate, lane-aligned projection dots (no (tk, 3*Hp) intermediate).
        k = jnp.dot(xk, w_ref[:, 0:hp],
                    preferred_element_type=jnp.float32).astype(dt)
        v = jnp.dot(xk, w_ref[:, 2 * hp:3 * hp],
                    preferred_element_type=jnp.float32).astype(dt)

        # Scores on the MXU, contracting the head dims (no transpose materialized).
        s = lax.dot_general(q, k, (((1,), (1,)), ((), ())),
                            preferred_element_type=jnp.float32)  # (tq, tk) f32

        # Causal mask with global indices (only bites on the diagonal tile).
        row = q_start + lax.broadcasted_iota(jnp.int32, (tq, tk), 0)
        col = k_start + lax.broadcasted_iota(jnp.int32, (tq, tk), 1)
        s = jnp.where(col <= row, s, -jnp.inf)

        # Online softmax update, all stats in f32.
        # (Lane-replicating m/l would save a per-step broadcast, but is
        #  negligible at block_size=128 where there is a single KV step.)
        m_prev = m_sc[...]
        m_new = jnp.maximum(m_prev, jnp.max(s, axis=-1, keepdims=True))
        alpha = jnp.exp(m_prev - m_new)
        p = jnp.exp(s - m_new)                                  # (tq, tk) f32
        l_sc[...] = alpha * l_sc[...] + jnp.sum(p, axis=-1, keepdims=True)
        acc_sc[...] = alpha * acc_sc[...] + jnp.dot(
            p.astype(dt), v, preferred_element_type=jnp.float32)
        m_sc[...] = m_new

    # Exact normalization (runs once per tile, so the exact divide is ~free;
    # the previous approx reciprocal caused the tolerance failure).
    out = acc_sc[...] / l_sc[...]                               # (tq, Hp) f32
    o_ref[...] = out[:, :h].astype(o_ref.dtype)


def prepare_head_weights(wk, wq, wv):
    """One-time weight prep, hoisted out of the hot forward path.

    Pads the head dim to a lane-aligned multiple of 128 (zero columns do not
    perturb scores or the valid output columns), folds the 1/sqrt(H) attention
    scale into W_q, and packs [K | Q | V] into a single (C, 3*Hp) slab.
    """
    C, H = wk.shape
    Hp = _round_up(H, 128)
    pad = Hp - H
    scale = float(H) ** -0.5            # matches PyTorch: k.shape[-1] ** -0.5
    wk_p = jnp.pad(wk, ((0, 0), (0, pad)))
    wq_p = jnp.pad(wq * scale, ((0, 0), (0, pad)))
    wv_p = jnp.pad(wv, ((0, 0), (0, pad)))
    return jnp.concatenate([wk_p, wq_p, wv_p], axis=1)          # (C, 3*Hp)


@functools.partial(jax.jit, static_argnames=("head_size",))
def head_forward(x, w_kqv, *, head_size):
    B, T, C = x.shape
    Hp = w_kqv.shape[1] // 3
    H = head_size

    # Query/key tile size: 128 if it divides T, otherwise full extent
    # (block_size=128 in the source module, so T <= 128 in practice).
    tq = 128 if T % 128 == 0 else T
    # Guarantee >=2 parallel grid steps so both v7x TensorCores get work.
    if B * (T // tq) < 2 and tq % 2 == 0 and T % (tq // 2) == 0:
        tq //= 2
    num_q = T // tq

    # VMEM footprint per step: x block (T*C), packed weights (C*3*Hp), f32
    # accumulator (tq*Hp) -> ~2 MiB at these shapes; 32 MiB is within every
    # chip's scoped limit (incl. v7x's 64 MiB physical VMEM).
    vmem_limit = 32 * 1024 * 1024

    return pl.pallas_call(
        fused_head_kernel,
        out_shape=jax.ShapeDtypeStruct((B, T, H), x.dtype),
        grid_spec=pltpu.PrefetchScalarGridSpec(
            num_scalar_prefetch=0,
            grid=(B, num_q),
            in_specs=[
                # Full sequence per batch; block index constant in the q axis,
                # so Pallas fetches it once per batch element.
                pl.BlockSpec((pl.Squeezed(), T, C), lambda b, i: (b, 0, 0)),
                # Packed weights: one constant block for the whole grid.
                pl.BlockSpec((C, 3 * Hp), lambda b, i: (0, 0)),
            ],
            out_specs=pl.BlockSpec((pl.Squeezed(), tq, H),
                                   lambda b, i: (b, i, 0)),
            scratch_shapes=[
                pltpu.VMEM((tq, 1), jnp.float32),    # running max  m
                pltpu.VMEM((tq, 1), jnp.float32),    # running sum  l
                pltpu.VMEM((tq, Hp), jnp.float32),   # output accumulator
            ],
        ),
        compiler_params=pltpu.CompilerParams(
            dimension_semantics=("parallel", "parallel"),
            vmem_limit_bytes=vmem_limit,
        ),
    )(x, w_kqv)


def head_reference(x, wk, wq, wv):
    # Pure-JAX reference mirroring the PyTorch forward (eval-mode dropout).
    k = x @ wk
    q = x @ wq
    v = x @ wv
    T = x.shape[1]
    wei = (q @ jnp.swapaxes(k, -2, -1)) * (k.shape[-1] ** -0.5)
    tril = jnp.tril(jnp.ones((T, T), dtype=bool))
    wei = jnp.where(tril, wei, -jnp.inf)
    wei = jax.nn.softmax(wei, axis=-1)
    return wei @ v


if __name__ == "__main__":
    # Shapes consistent with the module: T = block_size = 128, C = n_embd = 384,
    # a typical head_size of 64, small batch.
    B, T, C, H = 2, 128, 384, 64

    key = jax.random.PRNGKey(0)
    kx, kk, kq, kv = jax.random.split(key, 4)

    x = jax.random.normal(kx, (B, T, C), dtype=jnp.float32)
    # deterministic "Linear(n_embd, head_size, bias=False)" weights, stored
    # transposed as (C, H) so y = x @ W matches PyTorch's x @ W_torch.T
    wk = jax.random.normal(kk, (C, H), dtype=jnp.float32) * (C ** -0.5)
    wq = jax.random.normal(kq, (C, H), dtype=jnp.float32) * (C ** -0.5)
    wv = jax.random.normal(kv, (C, H), dtype=jnp.float32) * (C ** -0.5)

    # One-time weight preparation (pad + scale-fold + pack), outside the forward.
    w_kqv = prepare_head_weights(wk, wq, wv)
    w_kqv = jax.block_until_ready(w_kqv)

    out = head_forward(x, w_kqv, head_size=H)
    out = jax.block_until_ready(out)

    ref = head_reference(x, wk, wq, wv)
    assert out.shape == (B, T, H)
    max_diff = float(jnp.max(jnp.abs(out - ref)))
    assert jnp.allclose(out, ref, atol=2e-3, rtol=2e-3), (
        f"max abs diff {max_diff}"
    )

    print("KERNEL_OK")
</pallas_src>

<mosaic_0001>
module attributes {stable_mosaic.version = 11 : i64} {
  func.func @fused_head_kernel(%arg0: i32, %arg1: i32, %arg2: memref<1x128x384xf32, #tpu.memory_space<vmem>>, %arg3: memref<384x384xf32, #tpu.memory_space<vmem>>, %arg4: memref<1x128x64xf32, #tpu.memory_space<vmem>>, %arg5: memref<128x1xf32, #tpu.memory_space<vmem>>, %arg6: memref<128x1xf32, #tpu.memory_space<vmem>>, %arg7: memref<128x128xf32, #tpu.memory_space<vmem>>) attributes {dimension_semantics = [#tpu.dimension_semantics<parallel>, #tpu.dimension_semantics<parallel>], iteration_bounds = array<i64: 2, 1>, scalar_prefetch = 0 : i64, scratch_operands = 3 : i64, tpu.core_type = #tpu.core_type<tc>, window_params = [{transform_indices = @transform_0, window_bounds = array<i64: 1, 128, 384>}, {pipeline_mode = #tpu.pipeline_mode<synchronous>, transform_indices = @transform_1, window_bounds = array<i64: 384, 384>}, {transform_indices = @transform_2, window_bounds = array<i64: 1, 128, 64>}]} {
    %cst = arith.constant 0xFF800000 : f32
    %0 = vector.broadcast %cst : f32 to vector<128x1xf32>
    %c0 = arith.constant 0 : index
    %c0_0 = arith.constant 0 : index
    %1 = vector.load %arg5[%c0, %c0_0] : memref<128x1xf32, #tpu.memory_space<vmem>>, vector<128x1xf32>
    tpu.vector_store %arg5[%c0, %c0_0], %0 {strides = array<i32>} : memref<128x1xf32, #tpu.memory_space<vmem>>, vector<128x1xf32>,
    %cst_1 = arith.constant 0.000000e+00 : f32
    %2 = vector.broadcast %cst_1 : f32 to vector<128x1xf32>
    %c0_2 = arith.constant 0 : index
    %c0_3 = arith.constant 0 : index
    %3 = vector.load %arg6[%c0_2, %c0_3] : memref<128x1xf32, #tpu.memory_space<vmem>>, vector<128x1xf32>
    tpu.vector_store %arg6[%c0_2, %c0_3], %2 {strides = array<i32>} : memref<128x1xf32, #tpu.memory_space<vmem>>, vector<128x1xf32>,
    %cst_4 = arith.constant 0.000000e+00 : f32
    %4 = vector.broadcast %cst_4 : f32 to vector<128x128xf32>
    %c0_5 = arith.constant 0 : index
    %c0_6 = arith.constant 0 : index
    %5 = vector.load %arg7[%c0_5, %c0_6] : memref<128x128xf32, #tpu.memory_space<vmem>>, vector<128x128xf32>
    tpu.vector_store %arg7[%c0_5, %c0_6], %4 {strides = array<i32>} : memref<128x128xf32, #tpu.memory_space<vmem>>, vector<128x128xf32>,
    %c128_i32 = arith.constant 128 : i32
    %6 = arith.muli %arg1, %c128_i32 : i32
    %7 = tpu.assume_multiple %6, 128 : i32
    %c0_7 = arith.constant 0 : index
    %8 = arith.index_cast %7 : i32 to index
    %c0_8 = arith.constant 0 : index
    %9 = vector.load %arg2[%c0_7, %8, %c0_8] : memref<1x128x384xf32, #tpu.memory_space<vmem>>, vector<1x128x384xf32>
    %10 = vector.shape_cast %9 : vector<1x128x384xf32> to vector<128x384xf32>
    %c0_9 = arith.constant 0 : index
    %c128 = arith.constant 128 : index
    %11 = vector.load %arg3[%c0_9, %c128] : memref<384x384xf32, #tpu.memory_space<vmem>>, vector<384x128xf32>
    %cst_10 = arith.constant dense<0.000000e+00> : vector<128x128xf32>
    %12 = tpu.matmul %10, %11, %cst_10 {dimension_numbers = #tpu.dot_dimension_numbers<[1], [0], [0], [1], [0, 0, 1, 1], [], []>} : vector<128x384xf32>, vector<384x128xf32>, vector<128x128xf32> -> vector<128x128xf32>
    %c1_i32 = arith.constant 1 : i32
    %13 = arith.addi %arg1, %c1_i32 : i32
    %c0_i32 = arith.constant 0 : i32
    %14 = arith.subi %13, %c0_i32 : i32
    %c1_i32_11 = arith.constant 1 : i32
    %c1_i32_12 = arith.constant 1 : i32
    %15 = arith.subi %c1_i32_11, %c1_i32_12 : i32
    %16 = arith.addi %14, %15 : i32
    %c1_i32_13 = arith.constant 1 : i32
    %17 = arith.divsi %16, %c1_i32_13 : i32
    %c1_i32_14 = arith.constant 1 : i32
    %c0_i32_15 = arith.constant 0 : i32
    %c0_i32_16 = arith.constant 0 : i32
    %18 = arith.subi %17, %c0_i32_16 : i32
    %19 = arith.addi %c0_i32_16, %18 : i32
    %c1_i32_17 = arith.constant 1 : i32
    scf.for %arg8 = %c0_i32_16 to %19 step %c1_i32_17  : i32 {
      %28 = arith.muli %arg8, %c1_i32_14 : i32
      %29 = arith.addi %c0_i32_15, %28 : i32
      %c128_i32_25 = arith.constant 128 : i32
      %30 = arith.muli %29, %c128_i32_25 : i32
      %31 = tpu.assume_multiple %30, 128 : i32
      %c0_26 = arith.constant 0 : index
      %32 = arith.index_cast %31 : i32 to index
      %c0_27 = arith.constant 0 : index
      %33 = vector.load %arg2[%c0_26, %32, %c0_27] : memref<1x128x384xf32, #tpu.memory_space<vmem>>, vector<1x128x384xf32>
      %34 = vector.shape_cast %33 : vector<1x128x384xf32> to vector<128x384xf32>
      %c0_28 = arith.constant 0 : index
      %c0_29 = arith.constant 0 : index
      %35 = vector.load %arg3[%c0_28, %c0_29] : memref<384x384xf32, #tpu.memory_space<vmem>>, vector<384x128xf32>
      %cst_30 = arith.constant dense<0.000000e+00> : vector<128x128xf32>
      %36 = tpu.matmul %34, %35, %cst_30 {dimension_numbers = #tpu.dot_dimension_numbers<[1], [0], [0], [1], [0, 0, 1, 1], [], []>} : vector<128x384xf32>, vector<384x128xf32>, vector<128x128xf32> -> vector<128x128xf32>
      %c0_31 = arith.constant 0 : index
      %c256 = arith.constant 256 : index
      %37 = vector.load %arg3[%c0_31, %c256] : memref<384x384xf32, #tpu.memory_space<vmem>>, vector<384x128xf32>
      %cst_32 = arith.constant dense<0.000000e+00> : vector<128x128xf32>
      %38 = tpu.matmul %34, %37, %cst_32 {dimension_numbers = #tpu.dot_dimension_numbers<[1], [0], [0], [1], [0, 0, 1, 1], [], []>} : vector<128x384xf32>, vector<384x128xf32>, vector<128x128xf32> -> vector<128x128xf32>
      %cst_33 = arith.constant dense<0.000000e+00> : vector<128x128xf32>
      %39 = tpu.matmul %12, %36, %cst_33 {dimension_numbers = #tpu.dot_dimension_numbers<[1], [1], [0], [0], [0, 0, 1, 0], [], []>} : vector<128x128xf32>, vector<128x128xf32>, vector<128x128xf32> -> vector<128x128xf32>
      %40 = tpu.iota {dimensions = array<i32: 0>} : vector<128x128xi32>
      %41 = vector.broadcast %7 : i32 to vector<128x128xi32>
      %42 = arith.addi %41, %40 : vector<128x128xi32>
      %43 = tpu.iota {dimensions = array<i32: 1>} : vector<128x128xi32>
      %44 = vector.broadcast %31 : i32 to vector<128x128xi32>
      %45 = arith.addi %44, %43 : vector<128x128xi32>
      %46 = arith.cmpi sle, %45, %42 : vector<128x128xi32>
      %cst_34 = arith.constant 0xFF800000 : f32
      %47 = vector.broadcast %cst_34 : f32 to vector<128x128xf32>
      %48 = arith.select %46, %39, %47 : vector<128x128xi1>, vector<128x128xf32>
      %c0_35 = arith.constant 0 : index
      %c0_36 = arith.constant 0 : index
      %49 = vector.load %arg5[%c0_35, %c0_36] : memref<128x1xf32, #tpu.memory_space<vmem>>, vector<128x1xf32>
      %cst_37 = arith.constant dense<0xFF800000> : vector<128xf32>
      %50 = vector.multi_reduction <maximumf>, %48, %cst_37 [1] : vector<128x128xf32> to vector<128xf32>
      %51 = vector.shape_cast %50 : vector<128xf32> to vector<128x1xf32>
      %52 = arith.maximumf %49, %51 : vector<128x1xf32>
      %53 = arith.subf %49, %52 : vector<128x1xf32>
      %54 = math.exp %53 : vector<128x1xf32>
      %55 = vector.broadcast %52 : vector<128x1xf32> to vector<128x128xf32>
      %56 = arith.subf %48, %55 : vector<128x128xf32>
      %57 = math.exp %56 : vector<128x128xf32>
      %c0_38 = arith.constant 0 : index
      %c0_39 = arith.constant 0 : index
      %58 = vector.load %arg6[%c0_38, %c0_39] : memref<128x1xf32, #tpu.memory_space<vmem>>, vector<128x1xf32>
      %59 = arith.mulf %54, %58 : vector<128x1xf32>
      %cst_40 = arith.constant dense<0.000000e+00> : vector<128xf32>
      %60 = vector.multi_reduction <add>, %57, %cst_40 [1] : vector<128x128xf32> to vector<128xf32>
      %61 = vector.shape_cast %60 : vector<128xf32> to vector<128x1xf32>
      %62 = arith.addf %59, %61 : vector<128x1xf32>
      %c0_41 = arith.constant 0 : index
      %c0_42 = arith.constant 0 : index
      %63 = vector.load %arg6[%c0_41, %c0_42] : memref<128x1xf32, #tpu.memory_space<vmem>>, vector<128x1xf32>
      tpu.vector_store %arg6[%c0_41, %c0_42], %62 {strides = array<i32>} : memref<128x1xf32, #tpu.memory_space<vmem>>, vector<128x1xf32>,
      %c0_43 = arith.constant 0 : index
      %c0_44 = arith.constant 0 : index
      %64 = vector.load %arg7[%c0_43, %c0_44] : memref<128x128xf32, #tpu.memory_space<vmem>>, vector<128x128xf32>
      %65 = vector.broadcast %54 : vector<128x1xf32> to vector<128x128xf32>
      %66 = arith.mulf %65, %64 : vector<128x128xf32>
      %cst_45 = arith.constant dense<0.000000e+00> : vector<128x128xf32>
      %67 = tpu.matmul %57, %38, %cst_45 {dimension_numbers = #tpu.dot_dimension_numbers<[1], [0], [0], [1], [0, 0, 1, 1], [], []>} : vector<128x128xf32>, vector<128x128xf32>, vector<128x128xf32> -> vector<128x128xf32>
      %68 = arith.addf %66, %67 : vector<128x128xf32>
      %c0_46 = arith.constant 0 : index
      %c0_47 = arith.constant 0 : index
      %69 = vector.load %arg7[%c0_46, %c0_47] : memref<128x128xf32, #tpu.memory_space<vmem>>, vector<128x128xf32>
      tpu.vector_store %arg7[%c0_46, %c0_47], %68 {strides = array<i32>} : memref<128x128xf32, #tpu.memory_space<vmem>>, vector<128x128xf32>,
      %c0_48 = arith.constant 0 : index
      %c0_49 = arith.constant 0 : index
      %70 = vector.load %arg5[%c0_48, %c0_49] : memref<128x1xf32, #tpu.memory_space<vmem>>, vector<128x1xf32>
      tpu.vector_store %arg5[%c0_48, %c0_49], %52 {strides = array<i32>} : memref<128x1xf32, #tpu.memory_space<vmem>>, vector<128x1xf32>,
    }
    %c0_18 = arith.constant 0 : index
    %c0_19 = arith.constant 0 : index
    %20 = vector.load %arg7[%c0_18, %c0_19] : memref<128x128xf32, #tpu.memory_space<vmem>>, vector<128x128xf32>
    %c0_20 = arith.constant 0 : index
    %c0_21 = arith.constant 0 : index
    %21 = vector.load %arg6[%c0_20, %c0_21] : memref<128x1xf32, #tpu.memory_space<vmem>>, vector<128x1xf32>
    %22 = vector.broadcast %21 : vector<128x1xf32> to vector<128x128xf32>
    %23 = arith.divf %20, %22 : vector<128x128xf32>
    %24 = vector.extract_strided_slice %23 {offsets = [0, 0], sizes = [128, 64], strides = [1, 1]} : vector<128x128xf32> to vector<128x64xf32>
    %c0_22 = arith.constant 0 : index
    %c0_23 = arith.constant 0 : index
    %c0_24 = arith.constant 0 : index
    %25 = vector.load %arg4[%c0_22, %c0_23, %c0_24] : memref<1x128x64xf32, #tpu.memory_space<vmem>>, vector<1x128x64xf32>
    %26 = vector.shape_cast %25 : vector<1x128x64xf32> to vector<128x64xf32>
    %27 = vector.shape_cast %24 : vector<128x64xf32> to vector<1x128x64xf32>
    tpu.vector_store %arg4[%c0_22, %c0_23, %c0_24], %27 {strides = array<i32>} : memref<1x128x64xf32, #tpu.memory_space<vmem>>, vector<1x128x64xf32>,
    return
  }
  func.func @transform_0(%arg0: i32, %arg1: i32) -> (i32, i32, i32) {
    %c0_i32 = arith.constant 0 : i32
    %c0_i32_0 = arith.constant 0 : i32
    %c0_i32_1 = arith.constant 0 : i32
    return %arg0, %c0_i32, %c0_i32_0 : i32, i32, i32
  }
  func.func @transform_1(%arg0: i32, %arg1: i32) -> (i32, i32) {
    %c0_i32 = arith.constant 0 : i32
    %c0_i32_0 = arith.constant 0 : i32
    %c0_i32_1 = arith.constant 0 : i32
    return %c0_i32, %c0_i32_0 : i32, i32
  }
  func.func @transform_2(%arg0: i32, %arg1: i32) -> (i32, i32, i32) {
    %c0_i32 = arith.constant 0 : i32
    %c0_i32_0 = arith.constant 0 : i32
    return %arg0, %arg1, %c0_i32 : i32, i32, i32
  }
}

</mosaic_0001>

<llo_original>
// kernel: head_forward.1
$region0: #{head_forward.1}
  #allocation0 [shape = 'u32[]', space=smem, size = 0x4, offset = 0x4, fixed_abs, tag = 'smem constant byte address 0x4 - core index']
  #allocation1 [shape = 'u32[144,128]{1,0:T(1,128)}', space=vmem, size = 0x12000, scoped, tag = 'internal scratch']
  #allocation2 [shape = 'f32[128,1]{1,0:T(8,128)}', space=vmem, size = 0x10000, scoped, tag = 'scratch operand']
  #allocation3 [shape = 'f32[128,1]{1,0:T(8,128)}', space=vmem, size = 0x10000, scoped, tag = 'scratch operand']
  #allocation4 [shape = 'f32[128,128]{1,0:T(8,128)}', space=vmem, size = 0x10000, scoped, tag = 'scratch operand']
  %s0 = inlined_call_operand.hbm [shape: f32[2,128,384], index: 0, kind: input, shape index: {}]
  %s1 = inlined_call_operand.hbm [shape: f32[384,384], index: 1, kind: input, shape index: {}]
  %s2 = inlined_call_operand.vmem [shape: f32[2,128,64], index: 2, kind: output, shape index: {}]
  %s3 = sld [smem:[#allocation0]]
  $region56: #{head_forward.1} parent=0
    _
  %s5 = ssub.s32 1, %s3
  %s6 = scalar_select 0, %s5, %s3
  $region1: #{head_forward.1} parent=0
    #allocation5 [shape = 'u8[393216]{0}', space=vmem, size = 0x60000, scoped, tag = 'input window, operand 0']
    #allocation6 [shape = 's32[2]{0}', space=sflag, size = 0x8, scoped, tag = 'scoped memory for head_forward.1']
    #allocation7 [shape = 'u8[589824]{0}', space=vmem, size = 0x90000, scoped, tag = 'input window, operand 1, single buffered']
    #allocation8 [shape = 's32[1]{0}', space=sflag, size = 0x4, scoped, tag = 'scoped memory for head_forward.1']
    %7 = vsyncpa [#allocation6], 0
    %s8 = scalar_lea.sflag [#allocation6], 1
    %9 = vsyncpa %s8, 0
    %10 = vsyncpa [#allocation8], 0
    loop: start=0, step=1, limit=4
    $region2: #{head_forward.1} parent=1 // loop_pre_header
      _
    $region3: #{head_forward.1} parent=1 // loop_header
      %s12 = sphi 0, %s16
      %p13 = scmp.ge.s32.totalorder %s12, 4
      %s19 = sphi 0, %s31
      %s20 = sphi 0, %s27
      %s21 = sphi 0, %s19
      %s22 = sphi 0, %s20
      %s23 = sphi 0, %s21
      %s24 = sphi 0, %s22
      %s34 = sphi 0, %s36
      %s37 = sphi 0, %s34
      %s38 = sphi 0, %s37
      %s54 = sphi 0, %s38
      %s58 = sphi 0, %s58
      %s60 = sphi 0, %s58
      %s61 = sphi 0, %s60
      %s75 = sphi 0, %s61
      %s83 = sphi 0, %s85
      %s86 = sphi 0, %s83
      %s87 = sphi 0, %s86
      %s103 = sphi 0, %s87
    $region4: #{head_forward.1} parent=1 // loop_header_branch
      %15 = sbr.rel (%p13) target = $region8
    $region5: #{head_forward.1} parent=1 // loop_body
      %s17 = ssub.s32 %s12, 1
      %s18 = ssub.s32 %s12, 2
      %s25 = sadd.s32 1, %s20
      %p26 = scmp.ge.s32.totalorder %s25, 1
      %s27 = scalar_select %p26, 0, %s25
      %s28 = sadd.s32 1, %s19
      %s29 = scalar_select %p26, %s28, %s19
      %p30 = scmp.ge.s32.totalorder %s29, 2
      %s31 = scalar_select %p30, 0, %s29
      %s32 = ssub.s32 %s19, %s31
      %p33 = scmp.eq.s32.totalorder %s32, 0
      %s35 = sadd.s32 %s34, 1
      %s36 = scalar_select %p33, %s34, %s35
      %p39 = pneg %p33
      %p40 = scmp.eq.s32.totalorder %s12, 1
      %p41 = por %p39, %p40
      %p42 = scmp.ne.s32.totalorder %s34, %s37
      %p43 = scmp.eq.s32.totalorder %s12, 0
      %p44 = por %p42, %p43
      %p45 = scmp.ne.s32.totalorder %s34, %s37
      %p46 = scmp.eq.s32.totalorder %s17, 1
      %p47 = por %p45, %p46
      %p48 = scmp.ne.s32.totalorder %s37, %s38
      %p49 = scmp.eq.s32.totalorder %s17, 0
      %p50 = por %p48, %p49
      %p51 = scmp.ne.s32.totalorder %s37, %s38
      %p52 = scmp.eq.s32.totalorder %s18, 1
      %p53 = por %p51, %p52
      %p55 = scmp.ne.s32.totalorder %s38, %s54
      %p56 = scmp.eq.s32.totalorder %s18, 0
      %p57 = por %p55, %p56
      %s59 = sadd.s32 %s58, 1
      %p62 = scmp.eq.s32.totalorder %s12, 1
      %p63 = scmp.ne.s32.totalorder %s58, %s60
      %p64 = scmp.eq.s32.totalorder %s12, 0
      %p65 = por %p63, %p64
      %p66 = scmp.ne.s32.totalorder %s58, %s60
      %p67 = scmp.eq.s32.totalorder %s17, 1
      %p68 = por %p66, %p67
      %p69 = scmp.ne.s32.totalorder %s60, %s61
      %p70 = scmp.eq.s32.totalorder %s17, 0
      %p71 = por %p69, %p70
      %p72 = scmp.ne.s32.totalorder %s60, %s61
      %p73 = scmp.eq.s32.totalorder %s18, 1
      %p74 = por %p72, %p73
      %p76 = scmp.ne.s32.totalorder %s61, %s75
      %p77 = scmp.eq.s32.totalorder %s18, 0
      %p78 = por %p76, %p77
      %s79 = ssub.s32 %s19, %s31
      %s80 = ssub.s32 %s20, %s27
      %s81 = sor.u32 %s79, %s80
      %p82 = scmp.eq.s32.totalorder %s81, 0
      %s84 = sadd.s32 %s83, 1
      %s85 = scalar_select %p82, %s83, %s84
      %p88 = pneg %p82
      %p89 = scmp.eq.s32.totalorder %s12, 1
      %p90 = por %p88, %p89
      %p91 = scmp.ne.s32.totalorder %s83, %s86
      %p92 = scmp.eq.s32.totalorder %s12, 0
      %p93 = por %p91, %p92
      %p94 = scmp.ne.s32.totalorder %s83, %s86
      %p95 = scmp.eq.s32.totalorder %s17, 1
      %p96 = por %p94, %p95
      %p97 = scmp.ne.s32.totalorder %s86, %s87
      %p98 = scmp.eq.s32.totalorder %s17, 0
      %p99 = por %p97, %p98
      %p100 = scmp.ne.s32.totalorder %s86, %s87
      %p101 = scmp.eq.s32.totalorder %s18, 1
      %p102 = por %p100, %p101
      %p104 = scmp.ne.s32.totalorder %s87, %s103
      %p105 = scmp.eq.s32.totalorder %s18, 0
      %p106 = por %p104, %p105
      %p107 = scmp.le.s32.totalorder 1, %s12
      %p108 = scmp.lt.s32.totalorder %s12, 3
      %p109 = pnand %p107, %p108
      %p110 = pneg %p109
      // Predicated region
      $region9: #{head_forward.1} parent=5 // pred_check
        _
      $region10: #{head_forward.1} parent=5 // pred_check_branch
        %112 = sbr.rel (%p109) target = $region12
      $region11: #{head_forward.1} parent=5 // pred_region
        %s113 = ssub.s32 %s12, 1
        // Predicated region
        $region13: #{head_forward.1} parent=11 // pred_check
          %p114 = pneg %p71
        $region14: #{head_forward.1} parent=11 // pred_check_branch
          %116 = sbr.rel (%p114) target = $region16
        $region15: #{head_forward.1} parent=11 // pred_region
          %s118 = ssub.s32 18432, 18432
          %119 = vsyncadd [#allocation8], %s118
          %s120 = sshll.u32 [#allocation7], 4
          %s121 = int_to_ptr.vmem [resolvable:$true] %s120
          %126 = dma.hbm_to_vmem [thread:$0]  %s1, 18432, %s121, [#allocation8], 384, 384, 24
        $region16: #{head_forward.1} parent=11 // pred_fallthru
          _
      $region12: #{head_forward.1} parent=5 // pred_fallthru
        _
      %p127 = scmp.lt.s32.totalorder %s12, 2
      // Predicated region
      $region17: #{head_forward.1} parent=5 // pred_check
        %p128 = pneg %p127
      $region18: #{head_forward.1} parent=5 // pred_check_branch
        %130 = sbr.rel (%p128) target = $region20
      $region19: #{head_forward.1} parent=5 // pred_region
        // Predicated region
        $region21: #{head_forward.1} parent=19 // pred_check
          %p131 = pneg %p44
        $region22: #{head_forward.1} parent=19 // pred_check_branch
          %133 = sbr.rel (%p131) target = $region24
        $region23: #{head_forward.1} parent=19 // pred_region
          %s134 = sand.u32 %s34, 1
          %s135 = scalar_lea.sflag [#allocation6], %s134
          %s136 = sand.u32 %s34, 1
          %s137 = smul.addr %s136, 384
          %s138 = scalar_lea.vmem [#allocation5], %s137
          %s140 = ssub.s32 6144, 6144
          %141 = vsyncadd %s135, %s140
          %s142 = smul.addr %s19, 48
          %s143 = smul.addr %s142, 128
          %s144 = scalar_lea.hbm %s0, %s143
          %s145 = sshll.u32 %s138, 4
          %s146 = int_to_ptr.vmem [resolvable:$true] %s145
          %151 = dma.hbm_to_vmem [thread:$0]  %s144, 6144, %s146, %s135, 384, 384, 24
        $region24: #{head_forward.1} parent=19 // pred_fallthru
          _
      $region20: #{head_forward.1} parent=5 // pred_fallthru
        _
      %p152 = scmp.le.s32.totalorder 1, %s12
      %p153 = scmp.lt.s32.totalorder %s12, 3
      %p154 = pnand %p152, %p153
      %p155 = pneg %p154
      // Predicated region
      $region25: #{head_forward.1} parent=5 // pred_check
        _
      $region26: #{head_forward.1} parent=5 // pred_check_branch
        %157 = sbr.rel (%p154) target = $region28
      $region27: #{head_forward.1} parent=5 // pred_region
        %s158 = ssub.s32 %s12, 1
        %s159 = sand.u32 %s37, 1
        %s160 = scalar_lea.sflag [#allocation6], %s159
        %s161 = sand.u32 %s37, 1
        %s162 = smul.addr %s161, 384
        %s163 = scalar_lea.vmem [#allocation5], %s162
        // Predicated region
        $region29: #{head_forward.1} parent=27 // pred_check
          %p164 = pneg %p50
        $region30: #{head_forward.1} parent=27 // pred_check_branch
          %166 = sbr.rel (%p164) target = $region32
        $region31: #{head_forward.1} parent=27 // pred_region
          %167 = dma.done %s160, 6144
        $region32: #{head_forward.1} parent=27 // pred_fallthru
          _
        // Predicated region
        $region33: #{head_forward.1} parent=27 // pred_check
          %p168 = pneg %p71
        $region34: #{head_forward.1} parent=27 // pred_check_branch
          %170 = sbr.rel (%p168) target = $region36
        $region35: #{head_forward.1} parent=27 // pred_region
          %171 = dma.done [#allocation8], 18432
        $region36: #{head_forward.1} parent=27 // pred_fallthru
          _
        %s172 = sand.u32 %s37, 1
        %s173 = scalar_lea.sflag [#allocation6], %s172
        %s174 = sand.u32 %s37, 1
        %s175 = smul.addr %s174, 384
        %s176 = scalar_lea.vmem [#allocation5], %s175
        %p177 = pneg %p50
        %p178 = pneg %p47
        %p179 = pneg %p71
        %p180 = pneg %p68
        %p181 = pneg %p99
        %p182 = pneg %p96
        %s183 = smul.u32 16, %s22
        %p184 = scmp.lt.s32.totalorder %s21, 1
        %s185 = scalar_select %p184, %s21, 1
        %p186 = scmp.lt.s32.totalorder %s183, 15
        %s187 = scalar_select %p186, %s183, 15
        %s188 = smul.addr %s185, 16
        %s189 = sadd.s32 %s187, %s188
        %s190 = smul.addr %s189, 8
        %s191 = scalar_lea.vmem %s2, %s190
        %s192 = smul.u32 16, %s22
        %p193 = scmp.lt.s32.totalorder %s21, 1
        %s194 = scalar_select %p193, %s21, 1
        %p195 = scmp.lt.s32.totalorder %s192, 15
        %s196 = scalar_select %p195, %s192, 15
        %s197 = smul.addr %s194, 16
        %s198 = sadd.s32 %s196, %s197
        %s199 = smul.addr %s198, 8
        %s200 = scalar_lea.vmem %s2, %s199
        %s201 = smul.u32 16, %s22
        %vm202 = vcmask 7168
        %203 = vst.msk [vmem:[#allocation2] sm:$0xff] %vm202, -inf
        %204 = vst.msk [vmem:[#allocation2 + $0x8] sm:$0xff] %vm202, -inf
        %205 = vst.msk [vmem:[#allocation2 + $0x10] sm:$0xff] %vm202, -inf
        %206 = vst.msk [vmem:[#allocation2 + $0x18] sm:$0xff] %vm202, -inf
        %207 = vst.msk [vmem:[#allocation2 + $0x20] sm:$0xff] %vm202, -inf
        %208 = vst.msk [vmem:[#allocation2 + $0x28] sm:$0xff] %vm202, -inf
        %209 = vst.msk [vmem:[#allocation2 + $0x30] sm:$0xff] %vm202, -inf
        %210 = vst.msk [vmem:[#allocation2 + $0x38] sm:$0xff] %vm202, -inf
        %211 = vst.msk [vmem:[#allocation2 + $0x40] sm:$0xff] %vm202, -inf
        %212 = vst.msk [vmem:[#allocation2 + $0x48] sm:$0xff] %vm202, -inf
        %213 = vst.msk [vmem:[#allocation2 + $0x50] sm:$0xff] %vm202, -inf
        %214 = vst.msk [vmem:[#allocation2 + $0x58] sm:$0xff] %vm202, -inf
        %215 = vst.msk [vmem:[#allocation2 + $0x60] sm:$0xff] %vm202, -inf
        %216 = vst.msk [vmem:[#allocation2 + $0x68] sm:$0xff] %vm202, -inf
        %217 = vst.msk [vmem:[#allocation2 + $0x70] sm:$0xff] %vm202, -inf
        %218 = vst.msk [vmem:[#allocation2 + $0x78] sm:$0xff] %vm202, -inf
        %219 = vst.msk [vmem:[#allocation3] sm:$0xff] %vm202, 0.0
        %220 = vst.msk [vmem:[#allocation3 + $0x8] sm:$0xff] %vm202, 0.0
        %221 = vst.msk [vmem:[#allocation3 + $0x10] sm:$0xff] %vm202, 0.0
        %222 = vst.msk [vmem:[#allocation3 + $0x18] sm:$0xff] %vm202, 0.0
        %223 = vst.msk [vmem:[#allocation3 + $0x20] sm:$0xff] %vm202, 0.0
        %224 = vst.msk [vmem:[#allocation3 + $0x28] sm:$0xff] %vm202, 0.0
        %225 = vst.msk [vmem:[#allocation3 + $0x30] sm:$0xff] %vm202, 0.0
        %226 = vst.msk [vmem:[#allocation3 + $0x38] sm:$0xff] %vm202, 0.0
        %227 = vst.msk [vmem:[#allocation3 + $0x40] sm:$0xff] %vm202, 0.0
        %228 = vst.msk [vmem:[#allocation3 + $0x48] sm:$0xff] %vm202, 0.0
        %229 = vst.msk [vmem:[#allocation3 + $0x50] sm:$0xff] %vm202, 0.0
        %230 = vst.msk [vmem:[#allocation3 + $0x58] sm:$0xff] %vm202, 0.0
        %231 = vst.msk [vmem:[#allocation3 + $0x60] sm:$0xff] %vm202, 0.0
        %232 = vst.msk [vmem:[#allocation3 + $0x68] sm:$0xff] %vm202, 0.0
        %233 = vst.msk [vmem:[#allocation3 + $0x70] sm:$0xff] %vm202, 0.0
        %234 = vst.msk [vmem:[#allocation3 + $0x78] sm:$0xff] %vm202, 0.0
        %235 = vst [vmem:[#allocation4] sm:$0xff] 0.0
        %236 = vst [vmem:[#allocation4 + $0x8] sm:$0xff] 0.0
        %237 = vst [vmem:[#allocation4 + $0x10] sm:$0xff] 0.0
        %238 = vst [vmem:[#allocation4 + $0x18] sm:$0xff] 0.0
        %239 = vst [vmem:[#allocation4 + $0x20] sm:$0xff] 0.0
        %240 = vst [vmem:[#allocation4 + $0x28] sm:$0xff] 0.0
        %241 = vst [vmem:[#allocation4 + $0x30] sm:$0xff] 0.0
        %242 = vst [vmem:[#allocation4 + $0x38] sm:$0xff] 0.0
        %243 = vst [vmem:[#allocation4 + $0x40] sm:$0xff] 0.0
        %244 = vst [vmem:[#allocation4 + $0x48] sm:$0xff] 0.0
        %245 = vst [vmem:[#allocation4 + $0x50] sm:$0xff] 0.0
        %246 = vst [vmem:[#allocation4 + $0x58] sm:$0xff] 0.0
        %247 = vst [vmem:[#allocation4 + $0x60] sm:$0xff] 0.0
        %248 = vst [vmem:[#allocation4 + $0x68] sm:$0xff] 0.0
        %249 = vst [vmem:[#allocation4 + $0x70] sm:$0xff] 0.0
        %250 = vst [vmem:[#allocation4 + $0x78] sm:$0xff] 0.0
        %s251 = smul.u32 %s22, 128
        %s252 = sshra.s32 %s251, 3
        %s253 = sand.u32 %s251, 7
        %s254 = smul.u32 %s252, 3
        %s255 = smul.addr %s254, 8
        %s256 = scalar_lea.vmem %s163, %s255 [#allocation5]
        %v257 = vld [vmem:[%s256] sm:$0xff]
        %v258 = vld [vmem:[%s256 + $0x8] sm:$0xff]
        %v259 = vld [vmem:[%s256 + $0x10] sm:$0xff]
        %v260 = vld [vmem:[%s256 + $0x18] sm:$0xff]
        %v261 = vld [vmem:[%s256 + $0x20] sm:$0xff]
        %v262 = vld [vmem:[%s256 + $0x28] sm:$0xff]
        %v263 = vld [vmem:[%s256 + $0x30] sm:$0xff]
        %v264 = vld [vmem:[%s256 + $0x38] sm:$0xff]
        %v265 = vld [vmem:[%s256 + $0x40] sm:$0xff]
        %v266 = vld [vmem:[%s256 + $0x48] sm:$0xff]
        %v267 = vld [vmem:[%s256 + $0x50] sm:$0xff]
        %v268 = vld [vmem:[%s256 + $0x58] sm:$0xff]
        %v269 = vld [vmem:[%s256 + $0x60] sm:$0xff]
        %v270 = vld [vmem:[%s256 + $0x68] sm:$0xff]
        %v271 = vld [vmem:[%s256 + $0x70] sm:$0xff]
        %v272 = vld [vmem:[%s256 + $0x78] sm:$0xff]
        %v273 = vld [vmem:[%s256 + $0x80] sm:$0xff]
        %v274 = vld [vmem:[%s256 + $0x88] sm:$0xff]
        %v275 = vld [vmem:[%s256 + $0x90] sm:$0xff]
        %v276 = vld [vmem:[%s256 + $0x98] sm:$0xff]
        %v277 = vld [vmem:[%s256 + $0xa0] sm:$0xff]
        %v278 = vld [vmem:[%s256 + $0xa8] sm:$0xff]
        %v279 = vld [vmem:[%s256 + $0xb0] sm:$0xff]
        %v280 = vld [vmem:[%s256 + $0xb8] sm:$0xff]
        %v281 = vld [vmem:[%s256 + $0xc0] sm:$0xff]
        %v282 = vld [vmem:[%s256 + $0xc8] sm:$0xff]
        %v283 = vld [vmem:[%s256 + $0xd0] sm:$0xff]
        %v284 = vld [vmem:[%s256 + $0xd8] sm:$0xff]
        %v285 = vld [vmem:[%s256 + $0xe0] sm:$0xff]
        %v286 = vld [vmem:[%s256 + $0xe8] sm:$0xff]
        %v287 = vld [vmem:[%s256 + $0xf0] sm:$0xff]
        %v288 = vld [vmem:[%s256 + $0xf8] sm:$0xff]
        %v289 = vld [vmem:[%s256 + $0x100] sm:$0xff]
        %v290 = vld [vmem:[%s256 + $0x108] sm:$0xff]
        %v291 = vld [vmem:[%s256 + $0x110] sm:$0xff]
        %v292 = vld [vmem:[%s256 + $0x118] sm:$0xff]
        %v293 = vld [vmem:[%s256 + $0x120] sm:$0xff]
        %v294 = vld [vmem:[%s256 + $0x128] sm:$0xff]
        %v295 = vld [vmem:[%s256 + $0x130] sm:$0xff]
        %v296 = vld [vmem:[%s256 + $0x138] sm:$0xff]
        %v297 = vld [vmem:[%s256 + $0x140] sm:$0xff]
        %v298 = vld [vmem:[%s256 + $0x148] sm:$0xff]
        %v299 = vld [vmem:[%s256 + $0x150] sm:$0xff]
        %v300 = vld [vmem:[%s256 + $0x158] sm:$0xff]
        %v301 = vld [vmem:[%s256 + $0x160] sm:$0xff]
        %v302 = vld [vmem:[%s256 + $0x168] sm:$0xff]
        %v303 = vld [vmem:[%s256 + $0x170] sm:$0xff]
        %v304 = vld [vmem:[%s256 + $0x178] sm:$0xff]
        %v305 = vld [vmem:[#allocation7 + $0x8] sm:$0xff]
        %v306 = vld [vmem:[#allocation7 + $0x20] sm:$0xff]
        %v307 = vld [vmem:[#allocation7 + $0x38] sm:$0xff]
        %v308 = vld [vmem:[#allocation7 + $0x50] sm:$0xff]
        %v309 = vld [vmem:[#allocation7 + $0x68] sm:$0xff]
        %v310 = vld [vmem:[#allocation7 + $0x80] sm:$0xff]
        %v311 = vld [vmem:[#allocation7 + $0x98] sm:$0xff]
        %v312 = vld [vmem:[#allocation7 + $0xb0] sm:$0xff]
        %v313 = vld [vmem:[#allocation7 + $0xc8] sm:$0xff]
        %v314 = vld [vmem:[#allocation7 + $0xe0] sm:$0xff]
        %v315 = vld [vmem:[#allocation7 + $0xf8] sm:$0xff]
        %v316 = vld [vmem:[#allocation7 + $0x110] sm:$0xff]
        %v317 = vld [vmem:[#allocation7 + $0x128] sm:$0xff]
        %v318 = vld [vmem:[#allocation7 + $0x140] sm:$0xff]
        %v319 = vld [vmem:[#allocation7 + $0x158] sm:$0xff]
        %v320 = vld [vmem:[#allocation7 + $0x170] sm:$0xff]
        %v321 = vld [vmem:[#allocation7 + $0x188] sm:$0xff]
        %v322 = vld [vmem:[#allocation7 + $0x1a0] sm:$0xff]
        %v323 = vld [vmem:[#allocation7 + $0x1b8] sm:$0xff]
        %v324 = vld [vmem:[#allocation7 + $0x1d0] sm:$0xff]
        %v325 = vld [vmem:[#allocation7 + $0x1e8] sm:$0xff]
        %v326 = vld [vmem:[#allocation7 + $0x200] sm:$0xff]
        %v327 = vld [vmem:[#allocation7 + $0x218] sm:$0xff]
        %v328 = vld [vmem:[#allocation7 + $0x230] sm:$0xff]
        %v329 = vld [vmem:[#allocation7 + $0x248] sm:$0xff]
        %v330 = vld [vmem:[#allocation7 + $0x260] sm:$0xff]
        %v331 = vld [vmem:[#allocation7 + $0x278] sm:$0xff]
        %v332 = vld [vmem:[#allocation7 + $0x290] sm:$0xff]
        %v333 = vld [vmem:[#allocation7 + $0x2a8] sm:$0xff]
        %v334 = vld [vmem:[#allocation7 + $0x2c0] sm:$0xff]
        %v335 = vld [vmem:[#allocation7 + $0x2d8] sm:$0xff]
        %v336 = vld [vmem:[#allocation7 + $0x2f0] sm:$0xff]
        %v337 = vld [vmem:[#allocation7 + $0x308] sm:$0xff]
        %v338 = vld [vmem:[#allocation7 + $0x320] sm:$0xff]
        %v339 = vld [vmem:[#allocation7 + $0x338] sm:$0xff]
        %v340 = vld [vmem:[#allocation7 + $0x350] sm:$0xff]
        %v341 = vld [vmem:[#allocation7 + $0x368] sm:$0xff]
        %v342 = vld [vmem:[#allocation7 + $0x380] sm:$0xff]
        %v343 = vld [vmem:[#allocation7 + $0x398] sm:$0xff]
        %v344 = vld [vmem:[#allocation7 + $0x3b0] sm:$0xff]
        %v345 = vld [vmem:[#allocation7 + $0x3c8] sm:$0xff]
        %v346 = vld [vmem:[#allocation7 + $0x3e0] sm:$0xff]
        %v347 = vld [vmem:[#allocation7 + $0x3f8] sm:$0xff]
        %v348 = vld [vmem:[#allocation7 + $0x410] sm:$0xff]
        %v349 = vld [vmem:[#allocation7 + $0x428] sm:$0xff]
        %v350 = vld [vmem:[#allocation7 + $0x440] sm:$0xff]
        %v351 = vld [vmem:[#allocation7 + $0x458] sm:$0xff]
        %v352 = vld [vmem:[#allocation7 + $0x470] sm:$0xff]
        %353 = vmatprep.subr.mxu0 0.0
        %354 = vmatpush1.msra.mxu0 %v305
        %355 = vmatprep.subr.mxu0 0.0
        %356 = vmatpush1.msra.mxu0 %v306
        %357 = vmatprep.subr.mxu0 0.0
        %358 = vmatpush1.msra.mxu0 %v307
        %359 = vmatprep.subr.mxu0 0.0
        %360 = vmatpush1.msra.mxu0 %v308
        %361 = vmatprep.subr.mxu0 0.0
        %362 = vmatpush1.msra.mxu0 %v309
        %363 = vmatprep.subr.mxu0 0.0
        %364 = vmatpush1.msra.mxu0 %v310
        %365 = vmatprep.subr.mxu0 0.0
        %366 = vmatpush1.msra.mxu0 %v311
        %367 = vmatprep.subr.mxu0 0.0
        %368 = vmatpush1.msra.mxu0 %v312
        %369 = vmatprep.subr.mxu0 0.0
        %370 = vmatpush1.msra.mxu0 %v313
        %371 = vmatprep.subr.mxu0 0.0
        %372 = vmatpush1.msra.mxu0 %v314
        %373 = vmatprep.subr.mxu0 0.0
        %374 = vmatpush1.msra.mxu0 %v315
        %375 = vmatprep.subr.mxu0 0.0
        %376 = vmatpush1.msra.mxu0 %v316
        %377 = vmatprep.subr.mxu0 0.0
        %378 = vmatpush1.msra.mxu0 %v317
        %379 = vmatprep.subr.mxu0 0.0
        %380 = vmatpush1.msra.mxu0 %v318
        %381 = vmatprep.subr.mxu0 0.0
        %382 = vmatpush1.msra.mxu0 %v319
        %383 = vmatprep.subr.mxu0 0.0
        %384 = vmatpush1.msra.mxu0 %v320
        %385 = vmatprep.subr.mxu0 0.0
        %386 = vmatpush1.msra.mxu0 %v321
        %387 = vmatprep.subr.mxu0 0.0
        %388 = vmatpush1.msra.mxu0 %v322
        %389 = vmatprep.subr.mxu0 0.0
        %390 = vmatpush1.msra.mxu0 %v323
        %391 = vmatprep.subr.mxu0 0.0
        %392 = vmatpush1.msra.mxu0 %v324
        %393 = vmatprep.subr.mxu0 0.0
        %394 = vmatpush1.msra.mxu0 %v325
        %395 = vmatprep.subr.mxu0 0.0
        %396 = vmatpush1.msra.mxu0 %v326
        %397 = vmatprep.subr.mxu0 0.0
        %398 = vmatpush1.msra.mxu0 %v327
        %399 = vmatprep.subr.mxu0 0.0
        %400 = vmatpush1.msra.mxu0 %v328
        %401 = vmatprep.subr.mxu0 0.0
        %402 = vmatpush1.msra.mxu0 %v329
        %403 = vmatprep.subr.mxu0 0.0
        %404 = vmatpush1.msra.mxu0 %v330
        %405 = vmatprep.subr.mxu0 0.0
        %406 = vmatpush1.msra.mxu0 %v331
        %407 = vmatprep.subr.mxu0 0.0
        %408 = vmatpush1.msra.mxu0 %v332
        %409 = vmatprep.subr.mxu0 0.0
        %410 = vmatpush1.msra.mxu0 %v333
        %411 = vmatprep.subr.mxu0 0.0
        %412 = vmatpush1.msra.mxu0 %v334
        %413 = vmatprep.subr.mxu0 0.0
        %414 = vmatpush1.msra.mxu0 %v335
        %415 = vmatprep.subr.mxu0 0.0
        %416 = vmatpush1.msra.mxu0 %v336
        %417 = vmatprep.mubr.f32.mxu0 %v258
        %418 = vmatmul.mubr.f32.gmra.mrb[0].mxu0 %v257
        %v419 = vpop.f32.mrb[0].mxu0
        %v420 = vadd.f32 0.0, %v419
        %v421 = vpop.f32.mrb[0].mxu0
        %422 = vmatprep.mubr.f32.mxu0 %v261
        %423 = vmatmul.mubr.f32.gmra.mrb[0].mxu0 %v260
        %v424 = vpop.f32.mrb[0].mxu0
        %v425 = vadd.f32 0.0, %v424
        %v426 = vpop.f32.mrb[0].mxu0
        %427 = vmatprep.mubr.f32.mxu0 %v264
        %428 = vmatmul.mubr.f32.gmra.mrb[0].mxu0 %v263
        %v429 = vpop.f32.mrb[0].mxu0
        %v430 = vadd.f32 0.0, %v429
        %v431 = vpop.f32.mrb[0].mxu0
        %432 = vmatprep.mubr.f32.mxu0 %v267
        %433 = vmatmul.mubr.f32.gmra.mrb[0].mxu0 %v266
        %v434 = vpop.f32.mrb[0].mxu0
        %v435 = vadd.f32 0.0, %v434
        %v436 = vpop.f32.mrb[0].mxu0
        %437 = vmatprep.mubr.f32.mxu0 %v270
        %438 = vmatmul.mubr.f32.gmra.mrb[0].mxu0 %v269
        %v439 = vpop.f32.mrb[0].mxu0
        %v440 = vadd.f32 0.0, %v439
        %v441 = vpop.f32.mrb[0].mxu0
        %442 = vmatprep.mubr.f32.mxu0 %v273
        %443 = vmatmul.mubr.f32.gmra.mrb[0].mxu0 %v272
        %v444 = vpop.f32.mrb[0].mxu0
        %v445 = vadd.f32 0.0, %v444
        %v446 = vpop.f32.mrb[0].mxu0
        %447 = vmatprep.mubr.f32.mxu0 %v276
        %448 = vmatmul.mubr.f32.gmra.mrb[0].mxu0 %v275
        %v449 = vpop.f32.mrb[0].mxu0
        %v450 = vadd.f32 0.0, %v449
        %v451 = vpop.f32.mrb[0].mxu0
        %452 = vmatprep.mubr.f32.mxu0 %v279
        %453 = vmatmul.mubr.f32.gmra.mrb[0].mxu0 %v278
        %v454 = vpop.f32.mrb[0].mxu0
        %v455 = vadd.f32 0.0, %v454
        %v456 = vpop.f32.mrb[0].mxu0
        %457 = vmatprep.mubr.f32.mxu0 %v282
        %458 = vmatmul.mubr.f32.gmra.mrb[0].mxu0 %v281
        %v459 = vpop.f32.mrb[0].mxu0
        %v460 = vadd.f32 0.0, %v459
        %v461 = vpop.f32.mrb[0].mxu0
        %462 = vmatprep.mubr.f32.mxu0 %v285
        %463 = vmatmul.mubr.f32.gmra.mrb[0].mxu0 %v284
        %v464 = vpop.f32.mrb[0].mxu0
        %v465 = vadd.f32 0.0, %v464
        %v466 = vpop.f32.mrb[0].mxu0
        %467 = vmatprep.mubr.f32.mxu0 %v288
        %468 = vmatmul.mubr.f32.gmra.mrb[0].mxu0 %v287
        %v469 = vpop.f32.mrb[0].mxu0
        %v470 = vadd.f32 0.0, %v469
        %v471 = vpop.f32.mrb[0].mxu0
        %472 = vmatprep.mubr.f32.mxu0 %v291
        %473 = vmatmul.mubr.f32.gmra.mrb[0].mxu0 %v290
        %v474 = vpop.f32.mrb[0].mxu0
        %v475 = vadd.f32 0.0, %v474
        %v476 = vpop.f32.mrb[0].mxu0
        %477 = vmatprep.mubr.f32.mxu0 %v294
        %478 = vmatmul.mubr.f32.gmra.mrb[0].mxu0 %v293
        %v479 = vpop.f32.mrb[0].mxu0
        %v480 = vadd.f32 0.0, %v479
        %v481 = vpop.f32.mrb[0].mxu0
        %482 = vmatprep.mubr.f32.mxu0 %v297
        %483 = vmatmul.mubr.f32.gmra.mrb[0].mxu0 %v296
        %v484 = vpop.f32.mrb[0].mxu0
        %v485 = vadd.f32 0.0, %v484
        %v486 = vpop.f32.mrb[0].mxu0
        %487 = vmatprep.mubr.f32.mxu0 %v300
        %488 = vmatmul.mubr.f32.gmra.mrb[0].mxu0 %v299
        %v489 = vpop.f32.mrb[0].mxu0
        %v490 = vadd.f32 0.0, %v489
        %v491 = vpop.f32.mrb[0].mxu0
        %492 = vmatprep.mubr.f32.mxu0 %v303
        %493 = vmatmul.mubr.f32.gmra.mrb[0].mxu0 %v302
        %v494 = vpop.f32.mrb[0].mxu0
        %v495 = vadd.f32 0.0, %v494
        %v496 = vpop.f32.mrb[0].mxu0
        %497 = vdwg.mxu0
        %498 = vmatprep.subr.mxu0 0.0
        %499 = vmatpush1.msra.mxu0 %v337
        %500 = vmatprep.subr.mxu0 0.0
        %501 = vmatpush1.msra.mxu0 %v338
        %502 = vmatprep.subr.mxu0 0.0
        %503 = vmatpush1.msra.mxu0 %v339
        %504 = vmatprep.subr.mxu0 0.0
        %505 = vmatpush1.msra.mxu0 %v340
        %506 = vmatprep.subr.mxu0 0.0
        %507 = vmatpush1.msra.mxu0 %v341
        %508 = vmatprep.subr.mxu0 0.0
        %509 = vmatpush1.msra.mxu0 %v342
        %510 = vmatprep.subr.mxu0 0.0
        %511 = vmatpush1.msra.mxu0 %v343
        %512 = vmatprep.subr.mxu0 0.0
        %513 = vmatpush1.msra.mxu0 %v344
        %514 = vmatprep.subr.mxu0 0.0
        %515 = vmatpush1.msra.mxu0 %v345
        %516 = vmatprep.subr.mxu0 0.0
        %517 = vmatpush1.msra.mxu0 %v346
        %518 = vmatprep.subr.mxu0 0.0
        %519 = vmatpush1.msra.mxu0 %v347
        %520 = vmatprep.subr.mxu0 0.0
        %521 = vmatpush1.msra.mxu0 %v348
        %522 = vmatprep.subr.mxu0 0.0
        %523 = vmatpush1.msra.mxu0 %v349
        %524 = vmatprep.subr.mxu0 0.0
        %525 = vmatpush1.msra.mxu0 %v350
        %526 = vmatprep.subr.mxu0 0.0
        %527 = vmatpush1.msra.mxu0 %v351
        %528 = vmatprep.subr.mxu0 0.0
        %529 = vmatpush1.msra.mxu0 %v352
        %530 = vmatprep.subr.mxu0 0.0
        %531 = vmatpush1.msra.mxu0 0.0
        %532 = vmatprep.subr.mxu0 0.0
        %533 = vmatpush1.msra.mxu0 0.0
        %534 = vmatprep.subr.mxu0 0.0
        %535 = vmatpush1.msra.mxu0 0.0
        %536 = vmatprep.subr.mxu0 0.0
        %537 = vmatpush1.msra.mxu0 0.0
        %538 = vmatprep.subr.mxu0 0.0
        %539 = vmatpush1.msra.mxu0 0.0
        %540 = vmatprep.subr.mxu0 0.0
        %541 = vmatpush1.msra.mxu0 0.0
        %542 = vmatprep.subr.mxu0 0.0
        %543 = vmatpush1.msra.mxu0 0.0
        %544 = vmatprep.subr.mxu0 0.0
        %545 = vmatpush1.msra.mxu0 0.0
        %546 = vmatprep.subr.mxu0 0.0
        %547 = vmatpush1.msra.mxu0 0.0
        %548 = vmatprep.subr.mxu0 0.0
        %549 = vmatpush1.msra.mxu0 0.0
        %550 = vmatprep.subr.mxu0 0.0
        %551 = vmatpush1.msra.mxu0 0.0
        %552 = vmatprep.subr.mxu0 0.0
        %553 = vmatpush1.msra.mxu0 0.0
        %554 = vmatprep.subr.mxu0 0.0
        %555 = vmatpush1.msra.mxu0 0.0
        %556 = vmatprep.subr.mxu0 0.0
        %557 = vmatpush1.msra.mxu0 0.0
        %558 = vmatprep.subr.mxu0 0.0
        %559 = vmatpush1.msra.mxu0 0.0
        %560 = vmatprep.subr.mxu0 0.0
        %561 = vmatpush1.msra.mxu0 0.0
        %562 = vmatprep.mubr.f32.mxu0 0.0
        %563 = vmatmul.mubr.f32.gmra.mrb[0].mxu0 %v259
        %v564 = vpop.f32.mrb[0].mxu0
        %v565 = vadd.f32 %v420, %v564
        %v566 = vpop.f32.mrb[0].mxu0
        %567 = vmatprep.mubr.f32.mxu0 0.0
        %568 = vmatmul.mubr.f32.gmra.mrb[0].mxu0 %v262
        %v569 = vpop.f32.mrb[0].mxu0
        %v570 = vadd.f32 %v425, %v569
        %v571 = vpop.f32.mrb[0].mxu0
        %572 = vmatprep.mubr.f32.mxu0 0.0
        %573 = vmatmul.mubr.f32.gmra.mrb[0].mxu0 %v265
        %v574 = vpop.f32.mrb[0].mxu0
        %v575 = vadd.f32 %v430, %v574
        %v576 = vpop.f32.mrb[0].mxu0
        %577 = vmatprep.mubr.f32.mxu0 0.0
        %578 = vmatmul.mubr.f32.gmra.mrb[0].mxu0 %v268
        %v579 = vpop.f32.mrb[0].mxu0
        %v580 = vadd.f32 %v435, %v579
        %v581 = vpop.f32.mrb[0].mxu0
        %582 = vmatprep.mubr.f32.mxu0 0.0
        %583 = vmatmul.mubr.f32.gmra.mrb[0].mxu0 %v271
        %v584 = vpop.f32.mrb[0].mxu0
        %v585 = vadd.f32 %v440, %v584
        %v586 = vpop.f32.mrb[0].mxu0
        %587 = vmatprep.mubr.f32.mxu0 0.0
        %588 = vmatmul.mubr.f32.gmra.mrb[0].mxu0 %v274
        %v589 = vpop.f32.mrb[0].mxu0
        %v590 = vadd.f32 %v445, %v589
        %v591 = vpop.f32.mrb[0].mxu0
        %592 = vmatprep.mubr.f32.mxu0 0.0
        %593 = vmatmul.mubr.f32.gmra.mrb[0].mxu0 %v277
        %v594 = vpop.f32.mrb[0].mxu0
        %v595 = vadd.f32 %v450, %v594
        %v596 = vpop.f32.mrb[0].mxu0
        %597 = vmatprep.mubr.f32.mxu0 0.0
        %598 = vmatmul.mubr.f32.gmra.mrb[0].mxu0 %v280
        %v599 = vpop.f32.mrb[0].mxu0
        %v600 = vadd.f32 %v455, %v599
        %v601 = vpop.f32.mrb[0].mxu0
        %602 = vmatprep.mubr.f32.mxu0 0.0
        %603 = vmatmul.mubr.f32.gmra.mrb[0].mxu0 %v283
        %v604 = vpop.f32.mrb[0].mxu0
        %v605 = vadd.f32 %v460, %v604
        %v606 = vpop.f32.mrb[0].mxu0
        %607 = vmatprep.mubr.f32.mxu0 0.0
        %608 = vmatmul.mubr.f32.gmra.mrb[0].mxu0 %v286
        %v609 = vpop.f32.mrb[0].mxu0
        %v610 = vadd.f32 %v465, %v609
        %v611 = vpop.f32.mrb[0].mxu0
        %612 = vmatprep.mubr.f32.mxu0 0.0
        %613 = vmatmul.mubr.f32.gmra.mrb[0].mxu0 %v289
        %v614 = vpop.f32.mrb[0].mxu0
        %v615 = vadd.f32 %v470, %v614
        %v616 = vpop.f32.mrb[0].mxu0
        %617 = vmatprep.mubr.f32.mxu0 0.0
        %618 = vmatmul.mubr.f32.gmra.mrb[0].mxu0 %v292
        %v619 = vpop.f32.mrb[0].mxu0
        %v620 = vadd.f32 %v475, %v619
        %v621 = vpop.f32.mrb[0].mxu0
        %622 = vmatprep.mubr.f32.mxu0 0.0
        %623 = vmatmul.mubr.f32.gmra.mrb[0].mxu0 %v295
        %v624 = vpop.f32.mrb[0].mxu0
        %v625 = vadd.f32 %v480, %v624
        %v626 = vpop.f32.mrb[0].mxu0
        %627 = vmatprep.mubr.f32.mxu0 0.0
        %628 = vmatmul.mubr.f32.gmra.mrb[0].mxu0 %v298
        %v629 = vpop.f32.mrb[0].mxu0
        %v630 = vadd.f32 %v485, %v629
        %v631 = vpop.f32.mrb[0].mxu0
        %632 = vmatprep.mubr.f32.mxu0 0.0
        %633 = vmatmul.mubr.f32.gmra.mrb[0].mxu0 %v301
        %v634 = vpop.f32.mrb[0].mxu0
        %v635 = vadd.f32 %v490, %v634
        %v636 = vpop.f32.mrb[0].mxu0
        %637 = vmatprep.mubr.f32.mxu0 0.0
        %638 = vmatmul.mubr.f32.gmra.mrb[0].mxu0 %v304
        %v639 = vpop.f32.mrb[0].mxu0
        %v640 = vadd.f32 %v495, %v639
        %v641 = vpop.f32.mrb[0].mxu0
        %642 = vdwg.mxu0
        %s643 = sadd.s32 %s22, 1
        // While loop
        $region37: #{head_forward.1} parent=27 // loop_pre_header
          _
        $region38: #{head_forward.1} parent=27 // loop_header
          %s645 = sphi 0, %s647
          %p646 = scmp.ge.s32.totalorder %s645, %s643
        $region39: #{head_forward.1} parent=27 // loop_header_branch
          %649 = sbr.rel (%p646) target = $region43
        $region40: #{head_forward.1} parent=27 // loop_body
          %s650 = smul.u32 %s645, 128
          %s651 = sshra.s32 %s650, 3
          %s652 = sand.u32 %s650, 7
          %s653 = smul.u32 %s651, 3
          %s654 = smul.addr %s653, 8
          %s655 = scalar_lea.vmem %s163, %s654 [#allocation5]
          %v656 = vld [vmem:[%s655] sm:$0xff]
          %v657 = vld [vmem:[%s655 + $0x8] sm:$0xff]
          %v658 = vld [vmem:[%s655 + $0x10] sm:$0xff]
          %v659 = vld [vmem:[%s655 + $0x18] sm:$0xff]
          %v660 = vld [vmem:[%s655 + $0x20] sm:$0xff]
          %v661 = vld [vmem:[%s655 + $0x28] sm:$0xff]
          %v662 = vld [vmem:[%s655 + $0x30] sm:$0xff]
          %v663 = vld [vmem:[%s655 + $0x38] sm:$0xff]
          %v664 = vld [vmem:[%s655 + $0x40] sm:$0xff]
          %v665 = vld [vmem:[%s655 + $0x48] sm:$0xff]
          %v666 = vld [vmem:[%s655 + $0x50] sm:$0xff]
          %v667 = vld [vmem:[%s655 + $0x58] sm:$0xff]
          %v668 = vld [vmem:[%s655 + $0x60] sm:$0xff]
          %v669 = vld [vmem:[%s655 + $0x68] sm:$0xff]
          %v670 = vld [vmem:[%s655 + $0x70] sm:$0xff]
          %v671 = vld [vmem:[%s655 + $0x78] sm:$0xff]
          %v672 = vld [vmem:[%s655 + $0x80] sm:$0xff]
          %v673 = vld [vmem:[%s655 + $0x88] sm:$0xff]
          %v674 = vld [vmem:[%s655 + $0x90] sm:$0xff]
          %v675 = vld [vmem:[%s655 + $0x98] sm:$0xff]
          %v676 = vld [vmem:[%s655 + $0xa0] sm:$0xff]
          %v677 = vld [vmem:[%s655 + $0xa8] sm:$0xff]
          %v678 = vld [vmem:[%s655 + $0xb0] sm:$0xff]
          %v679 = vld [vmem:[%s655 + $0xb8] sm:$0xff]
          %v680 = vld [vmem:[%s655 + $0xc0] sm:$0xff]
          %v681 = vld [vmem:[%s655 + $0xc8] sm:$0xff]
          %v682 = vld [vmem:[%s655 + $0xd0] sm:$0xff]
          %v683 = vld [vmem:[%s655 + $0xd8] sm:$0xff]
          %v684 = vld [vmem:[%s655 + $0xe0] sm:$0xff]
          %v685 = vld [vmem:[%s655 + $0xe8] sm:$0xff]
          %v686 = vld [vmem:[%s655 + $0xf0] sm:$0xff]
          %v687 = vld [vmem:[%s655 + $0xf8] sm:$0xff]
          %v688 = vld [vmem:[%s655 + $0x100] sm:$0xff]
          %v689 = vld [vmem:[%s655 + $0x108] sm:$0xff]
          %v690 = vld [vmem:[%s655 + $0x110] sm:$0xff]
          %v691 = vld [vmem:[%s655 + $0x118] sm:$0xff]
          %v692 = vld [vmem:[%s655 + $0x120] sm:$0xff]
          %v693 = vld [vmem:[%s655 + $0x128] sm:$0xff]
          %v694 = vld [vmem:[%s655 + $0x130] sm:$0xff]
          %v695 = vld [vmem:[%s655 + $0x138] sm:$0xff]
          %v696 = vld [vmem:[%s655 + $0x140] sm:$0xff]
          %v697 = vld [vmem:[%s655 + $0x148] sm:$0xff]
          %v698 = vld [vmem:[%s655 + $0x150] sm:$0xff]
          %v699 = vld [vmem:[%s655 + $0x158] sm:$0xff]
          %v700 = vld [vmem:[%s655 + $0x160] sm:$0xff]
          %v701 = vld [vmem:[%s655 + $0x168] sm:$0xff]
          %v702 = vld [vmem:[%s655 + $0x170] sm:$0xff]
          %v703 = vld [vmem:[%s655 + $0x178] sm:$0xff]
          %v704 = vld [vmem:[#allocation7] sm:$0xff]
          %v705 = vld [vmem:[#allocation7 + $0x18] sm:$0xff]
          %v706 = vld [vmem:[#allocation7 + $0x30] sm:$0xff]
          %v707 = vld [vmem:[#allocation7 + $0x48] sm:$0xff]
          %v708 = vld [vmem:[#allocation7 + $0x60] sm:$0xff]
          %v709 = vld [vmem:[#allocation7 + $0x78] sm:$0xff]
          %v710 = vld [vmem:[#allocation7 + $0x90] sm:$0xff]
          %v711 = vld [vmem:[#allocation7 + $0xa8] sm:$0xff]
          %v712 = vld [vmem:[#allocation7 + $0xc0] sm:$0xff]
          %v713 = vld [vmem:[#allocation7 + $0xd8] sm:$0xff]
          %v714 = vld [vmem:[#allocation7 + $0xf0] sm:$0xff]
          %v715 = vld [vmem:[#allocation7 + $0x108] sm:$0xff]
          %v716 = vld [vmem:[#allocation7 + $0x120] sm:$0xff]
          %v717 = vld [vmem:[#allocation7 + $0x138] sm:$0xff]
          %v718 = vld [vmem:[#allocation7 + $0x150] sm:$0xff]
          %v719 = vld [vmem:[#allocation7 + $0x168] sm:$0xff]
          %v720 = vld [vmem:[#allocation7 + $0x180] sm:$0xff]
          %v721 = vld [vmem:[#allocation7 + $0x198] sm:$0xff]
          %v722 = vld [vmem:[#allocation7 + $0x1b0] sm:$0xff]
          %v723 = vld [vmem:[#allocation7 + $0x1c8] sm:$0xff]
          %v724 = vld [vmem:[#allocation7 + $0x1e0] sm:$0xff]
          %v725 = vld [vmem:[#allocation7 + $0x1f8] sm:$0xff]
          %v726 = vld [vmem:[#allocation7 + $0x210] sm:$0xff]
          %v727 = vld [vmem:[#allocation7 + $0x228] sm:$0xff]
          %v728 = vld [vmem:[#allocation7 + $0x240] sm:$0xff]
          %v729 = vld [vmem:[#allocation7 + $0x258] sm:$0xff]
          %v730 = vld [vmem:[#allocation7 + $0x270] sm:$0xff]
          %v731 = vld [vmem:[#allocation7 + $0x288] sm:$0xff]
          %v732 = vld [vmem:[#allocation7 + $0x2a0] sm:$0xff]
          %v733 = vld [vmem:[#allocation7 + $0x2b8] sm:$0xff]
          %v734 = vld [vmem:[#allocation7 + $0x2d0] sm:$0xff]
          %v735 = vld [vmem:[#allocation7 + $0x2e8] sm:$0xff]
          %v736 = vld [vmem:[#allocation7 + $0x300] sm:$0xff]
          %v737 = vld [vmem:[#allocation7 + $0x318] sm:$0xff]
          %v738 = vld [vmem:[#allocation7 + $0x330] sm:$0xff]
          %v739 = vld [vmem:[#allocation7 + $0x348] sm:$0xff]
          %v740 = vld [vmem:[#allocation7 + $0x360] sm:$0xff]
          %v741 = vld [vmem:[#allocation7 + $0x378] sm:$0xff]
          %v742 = vld [vmem:[#allocation7 + $0x390] sm:$0xff]
          %v743 = vld [vmem:[#allocation7 + $0x3a8] sm:$0xff]
          %v744 = vld [vmem:[#allocation7 + $0x3c0] sm:$0xff]
          %v745 = vld [vmem:[#allocation7 + $0x3d8] sm:$0xff]
          %v746 = vld [vmem:[#allocation7 + $0x3f0] sm:$0xff]
          %v747 = vld [vmem:[#allocation7 + $0x408] sm:$0xff]
          %v748 = vld [vmem:[#allocation7 + $0x420] sm:$0xff]
          %v749 = vld [vmem:[#allocation7 + $0x438] sm:$0xff]
          %v750 = vld [vmem:[#allocation7 + $0x450] sm:$0xff]
          %v751 = vld [vmem:[#allocation7 + $0x468] sm:$0xff]
          %752 = vmatprep.subr.mxu0 0.0
          %753 = vmatpush1.msra.mxu0 %v704
          %754 = vmatprep.subr.mxu0 0.0
          %755 = vmatpush1.msra.mxu0 %v705
          %756 = vmatprep.subr.mxu0 0.0
          %757 = vmatpush1.msra.mxu0 %v706
          %758 = vmatprep.subr.mxu0 0.0
          %759 = vmatpush1.msra.mxu0 %v707
          %760 = vmatprep.subr.mxu0 0.0
          %761 = vmatpush1.msra.mxu0 %v708
          %762 = vmatprep.subr.mxu0 0.0
          %763 = vmatpush1.msra.mxu0 %v709
          %764 = vmatprep.subr.mxu0 0.0
          %765 = vmatpush1.msra.mxu0 %v710
          %766 = vmatprep.subr.mxu0 0.0
          %767 = vmatpush1.msra.mxu0 %v711
          %768 = vmatprep.subr.mxu0 0.0
          %769 = vmatpush1.msra.mxu0 %v712
          %770 = vmatprep.subr.mxu0 0.0
          %771 = vmatpush1.msra.mxu0 %v713
          %772 = vmatprep.subr.mxu0 0.0
          %773 = vmatpush1.msra.mxu0 %v714
          %774 = vmatprep.subr.mxu0 0.0
          %775 = vmatpush1.msra.mxu0 %v715
          %776 = vmatprep.subr.mxu0 0.0
          %777 = vmatpush1.msra.mxu0 %v716
          %778 = vmatprep.subr.mxu0 0.0
          %779 = vmatpush1.msra.mxu0 %v717
          %780 = vmatprep.subr.mxu0 0.0
          %781 = vmatpush1.msra.mxu0 %v718
          %782 = vmatprep.subr.mxu0 0.0
          %783 = vmatpush1.msra.mxu0 %v719
          %784 = vmatprep.subr.mxu0 0.0
          %785 = vmatpush1.msra.mxu0 %v720
          %786 = vmatprep.subr.mxu0 0.0
          %787 = vmatpush1.msra.mxu0 %v721
          %788 = vmatprep.subr.mxu0 0.0
          %789 = vmatpush1.msra.mxu0 %v722
          %790 = vmatprep.subr.mxu0 0.0
          %791 = vmatpush1.msra.mxu0 %v723
          %792 = vmatprep.subr.mxu0 0.0
          %793 = vmatpush1.msra.mxu0 %v724
          %794 = vmatprep.subr.mxu0 0.0
          %795 = vmatpush1.msra.mxu0 %v725
          %796 = vmatprep.subr.mxu0 0.0
          %797 = vmatpush1.msra.mxu0 %v726
          %798 = vmatprep.subr.mxu0 0.0
          %799 = vmatpush1.msra.mxu0 %v727
          %800 = vmatprep.subr.mxu0 0.0
          %801 = vmatpush1.msra.mxu0 %v728
          %802 = vmatprep.subr.mxu0 0.0
          %803 = vmatpush1.msra.mxu0 %v729
          %804 = vmatprep.subr.mxu0 0.0
          %805 = vmatpush1.msra.mxu0 %v730
          %806 = vmatprep.subr.mxu0 0.0
          %807 = vmatpush1.msra.mxu0 %v731
          %808 = vmatprep.subr.mxu0 0.0
          %809 = vmatpush1.msra.mxu0 %v732
          %810 = vmatprep.subr.mxu0 0.0
          %811 = vmatpush1.msra.mxu0 %v733
          %812 = vmatprep.subr.mxu0 0.0
          %813 = vmatpush1.msra.mxu0 %v734
          %814 = vmatprep.subr.mxu0 0.0
          %815 = vmatpush1.msra.mxu0 %v735
          %816 = vmatprep.mubr.f32.mxu0 %v657
          %817 = vmatmul.mubr.f32.gmra.mrb[0].mxu0 %v656
          %v818 = vpop.f32.mrb[0].mxu0
          %v819 = vadd.f32 0.0, %v818
          %v820 = vpop.f32.mrb[0].mxu0
          %821 = vmatprep.mubr.f32.mxu0 %v660
          %822 = vmatmul.mubr.f32.gmra.mrb[0].mxu0 %v659
          %v823 = vpop.f32.mrb[0].mxu0
          %v824 = vadd.f32 0.0, %v823
          %v825 = vpop.f32.mrb[0].mxu0
          %826 = vmatprep.mubr.f32.mxu0 %v663
          %827 = vmatmul.mubr.f32.gmra.mrb[0].mxu0 %v662
          %v828 = vpop.f32.mrb[0].mxu0
          %v829 = vadd.f32 0.0, %v828
          %v830 = vpop.f32.mrb[0].mxu0
          %831 = vmatprep.mubr.f32.mxu0 %v666
          %832 = vmatmul.mubr.f32.gmra.mrb[0].mxu0 %v665
          %v833 = vpop.f32.mrb[0].mxu0
          %v834 = vadd.f32 0.0, %v833
          %v835 = vpop.f32.mrb[0].mxu0
          %836 = vmatprep.mubr.f32.mxu0 %v669
          %837 = vmatmul.mubr.f32.gmra.mrb[0].mxu0 %v668
          %v838 = vpop.f32.mrb[0].mxu0
          %v839 = vadd.f32 0.0, %v838
          %v840 = vpop.f32.mrb[0].mxu0
          %841 = vmatprep.mubr.f32.mxu0 %v672
          %842 = vmatmul.mubr.f32.gmra.mrb[0].mxu0 %v671
          %v843 = vpop.f32.mrb[0].mxu0
          %v844 = vadd.f32 0.0, %v843
          %v845 = vpop.f32.mrb[0].mxu0
          %846 = vmatprep.mubr.f32.mxu0 %v675
          %847 = vmatmul.mubr.f32.gmra.mrb[0].mxu0 %v674
          %v848 = vpop.f32.mrb[0].mxu0
          %v849 = vadd.f32 0.0, %v848
          %v850 = vpop.f32.mrb[0].mxu0
          %851 = vmatprep.mubr.f32.mxu0 %v678
          %852 = vmatmul.mubr.f32.gmra.mrb[0].mxu0 %v677
          %v853 = vpop.f32.mrb[0].mxu0
          %v854 = vadd.f32 0.0, %v853
          %v855 = vpop.f32.mrb[0].mxu0
          %856 = vmatprep.mubr.f32.mxu0 %v681
          %857 = vmatmul.mubr.f32.gmra.mrb[0].mxu0 %v680
          %v858 = vpop.f32.mrb[0].mxu0
          %v859 = vadd.f32 0.0, %v858
          %v860 = vpop.f32.mrb[0].mxu0
          %861 = vmatprep.mubr.f32.mxu0 %v684
          %862 = vmatmul.mubr.f32.gmra.mrb[0].mxu0 %v683
          %v863 = vpop.f32.mrb[0].mxu0
          %v864 = vadd.f32 0.0, %v863
          %v865 = vpop.f32.mrb[0].mxu0
          %866 = vmatprep.mubr.f32.mxu0 %v687
          %867 = vmatmul.mubr.f32.gmra.mrb[0].mxu0 %v686
          %v868 = vpop.f32.mrb[0].mxu0
          %v869 = vadd.f32 0.0, %v868
          %v870 = vpop.f32.mrb[0].mxu0
          %871 = vmatprep.mubr.f32.mxu0 %v690
          %872 = vmatmul.mubr.f32.gmra.mrb[0].mxu0 %v689
          %v873 = vpop.f32.mrb[0].mxu0
          %v874 = vadd.f32 0.0, %v873
          %v875 = vpop.f32.mrb[0].mxu0
          %876 = vmatprep.mubr.f32.mxu0 %v693
          %877 = vmatmul.mubr.f32.gmra.mrb[0].mxu0 %v692
          %v878 = vpop.f32.mrb[0].mxu0
          %v879 = vadd.f32 0.0, %v878
          %v880 = vpop.f32.mrb[0].mxu0
          %881 = vmatprep.mubr.f32.mxu0 %v696
          %882 = vmatmul.mubr.f32.gmra.mrb[0].mxu0 %v695
          %v883 = vpop.f32.mrb[0].mxu0
          %v884 = vadd.f32 0.0, %v883
          %v885 = vpop.f32.mrb[0].mxu0
          %886 = vmatprep.mubr.f32.mxu0 %v699
          %887 = vmatmul.mubr.f32.gmra.mrb[0].mxu0 %v698
          %v888 = vpop.f32.mrb[0].mxu0
          %v889 = vadd.f32 0.0, %v888
          %v890 = vpop.f32.mrb[0].mxu0
          %891 = vmatprep.mubr.f32.mxu0 %v702
          %892 = vmatmul.mubr.f32.gmra.mrb[0].mxu0 %v701
          %v893 = vpop.f32.mrb[0].mxu0
          %v894 = vadd.f32 0.0, %v893
          %v895 = vpop.f32.mrb[0].mxu0
          %896 = vdwg.mxu0
          %897 = vmatprep.subr.mxu0 0.0
          %898 = vmatpush1.msra.mxu0 %v736
          %899 = vmatprep.subr.mxu0 0.0
          %900 = vmatpush1.msra.mxu0 %v737
          %901 = vmatprep.subr.mxu0 0.0
          %902 = vmatpush1.msra.mxu0 %v738
          %903 = vmatprep.subr.mxu0 0.0
          %904 = vmatpush1.msra.mxu0 %v739
          %905 = vmatprep.subr.mxu0 0.0
          %906 = vmatpush1.msra.mxu0 %v740
          %907 = vmatprep.subr.mxu0 0.0
          %908 = vmatpush1.msra.mxu0 %v741
          %909 = vmatprep.subr.mxu0 0.0
          %910 = vmatpush1.msra.mxu0 %v742
          %911 = vmatprep.subr.mxu0 0.0
          %912 = vmatpush1.msra.mxu0 %v743
          %913 = vmatprep.subr.mxu0 0.0
          %914 = vmatpush1.msra.mxu0 %v744
          %915 = vmatprep.subr.mxu0 0.0
          %916 = vmatpush1.msra.mxu0 %v745
          %917 = vmatprep.subr.mxu0 0.0
          %918 = vmatpush1.msra.mxu0 %v746
          %919 = vmatprep.subr.mxu0 0.0
          %920 = vmatpush1.msra.mxu0 %v747
          %921 = vmatprep.subr.mxu0 0.0
          %922 = vmatpush1.msra.mxu0 %v748
          %923 = vmatprep.subr.mxu0 0.0
          %924 = vmatpush1.msra.mxu0 %v749
          %925 = vmatprep.subr.mxu0 0.0
          %926 = vmatpush1.msra.mxu0 %v750
          %927 = vmatprep.subr.mxu0 0.0
          %928 = vmatpush1.msra.mxu0 %v751
          %929 = vmatprep.subr.mxu0 0.0
          %930 = vmatpush1.msra.mxu0 0.0
          %931 = vmatprep.subr.mxu0 0.0
          %932 = vmatpush1.msra.mxu0 0.0
          %933 = vmatprep.subr.mxu0 0.0
          %934 = vmatpush1.msra.mxu0 0.0
          %935 = vmatprep.subr.mxu0 0.0
          %936 = vmatpush1.msra.mxu0 0.0
          %937 = vmatprep.subr.mxu0 0.0
          %938 = vmatpush1.msra.mxu0 0.0
          %939 = vmatprep.subr.mxu0 0.0
          %940 = vmatpush1.msra.mxu0 0.0
          %941 = vmatprep.subr.mxu0 0.0
          %942 = vmatpush1.msra.mxu0 0.0
          %943 = vmatprep.subr.mxu0 0.0
          %944 = vmatpush1.msra.mxu0 0.0
          %945 = vmatprep.subr.mxu0 0.0
          %946 = vmatpush1.msra.mxu0 0.0
          %947 = vmatprep.subr.mxu0 0.0
          %948 = vmatpush1.msra.mxu0 0.0
          %949 = vmatprep.subr.mxu0 0.0
          %950 = vmatpush1.msra.mxu0 0.0
          %951 = vmatprep.subr.mxu0 0.0
          %952 = vmatpush1.msra.mxu0 0.0
          %953 = vmatprep.subr.mxu0 0.0
          %954 = vmatpush1.msra.mxu0 0.0
          %955 = vmatprep.subr.mxu0 0.0
          %956 = vmatpush1.msra.mxu0 0.0
          %957 = vmatprep.subr.mxu0 0.0
          %958 = vmatpush1.msra.mxu0 0.0
          %959 = vmatprep.subr.mxu0 0.0
          %960 = vmatpush1.msra.mxu0 0.0
          %961 = vmatprep.mubr.f32.mxu0 0.0
          %962 = vmatmul.mubr.f32.gmra.mrb[0].mxu0 %v658
          %v963 = vpop.f32.mrb[0].mxu0
          %v964 = vadd.f32 %v819, %v963
          %v965 = vpop.f32.mrb[0].mxu0
          %966 = vmatprep.mubr.f32.mxu0 0.0
          %967 = vmatmul.mubr.f32.gmra.mrb[0].mxu0 %v661
          %v968 = vpop.f32.mrb[0].mxu0
          %v969 = vadd.f32 %v824, %v968
          %v970 = vpop.f32.mrb[0].mxu0
          %971 = vmatprep.mubr.f32.mxu0 0.0
          %972 = vmatmul.mubr.f32.gmra.mrb[0].mxu0 %v664
          %v973 = vpop.f32.mrb[0].mxu0
          %v974 = vadd.f32 %v829, %v973
          %v975 = vpop.f32.mrb[0].mxu0
          %976 = vmatprep.mubr.f32.mxu0 0.0
          %977 = vmatmul.mubr.f32.gmra.mrb[0].mxu0 %v667
          %v978 = vpop.f32.mrb[0].mxu0
          %v979 = vadd.f32 %v834, %v978
          %v980 = vpop.f32.mrb[0].mxu0
          %981 = vmatprep.mubr.f32.mxu0 0.0
          %982 = vmatmul.mubr.f32.gmra.mrb[0].mxu0 %v670
          %v983 = vpop.f32.mrb[0].mxu0
          %v984 = vadd.f32 %v839, %v983
          %v985 = vpop.f32.mrb[0].mxu0
          %986 = vmatprep.mubr.f32.mxu0 0.0
          %987 = vmatmul.mubr.f32.gmra.mrb[0].mxu0 %v673
          %v988 = vpop.f32.mrb[0].mxu0
          %v989 = vadd.f32 %v844, %v988
          %v990 = vpop.f32.mrb[0].mxu0
          %991 = vmatprep.mubr.f32.mxu0 0.0
          %992 = vmatmul.mubr.f32.gmra.mrb[0].mxu0 %v676
          %v993 = vpop.f32.mrb[0].mxu0
          %v994 = vadd.f32 %v849, %v993
          %v995 = vpop.f32.mrb[0].mxu0
          %996 = vmatprep.mubr.f32.mxu0 0.0
          %997 = vmatmul.mubr.f32.gmra.mrb[0].mxu0 %v679
          %v998 = vpop.f32.mrb[0].mxu0
          %v999 = vadd.f32 %v854, %v998
          %v1000 = vpop.f32.mrb[0].mxu0
          %1001 = vmatprep.mubr.f32.mxu0 0.0
          %1002 = vmatmul.mubr.f32.gmra.mrb[0].mxu0 %v682
          %v1003 = vpop.f32.mrb[0].mxu0
          %v1004 = vadd.f32 %v859, %v1003
          %v1005 = vpop.f32.mrb[0].mxu0
          %1006 = vmatprep.mubr.f32.mxu0 0.0
          %1007 = vmatmul.mubr.f32.gmra.mrb[0].mxu0 %v685
          %v1008 = vpop.f32.mrb[0].mxu0
          %v1009 = vadd.f32 %v864, %v1008
          %v1010 = vpop.f32.mrb[0].mxu0
          %1011 = vmatprep.mubr.f32.mxu0 0.0
          %1012 = vmatmul.mubr.f32.gmra.mrb[0].mxu0 %v688
          %v1013 = vpop.f32.mrb[0].mxu0
          %v1014 = vadd.f32 %v869, %v1013
          %v1015 = vpop.f32.mrb[0].mxu0
          %1016 = vmatprep.mubr.f32.mxu0 0.0
          %1017 = vmatmul.mubr.f32.gmra.mrb[0].mxu0 %v691
          %v1018 = vpop.f32.mrb[0].mxu0
          %v1019 = vadd.f32 %v874, %v1018
          %v1020 = vpop.f32.mrb[0].mxu0
          %1021 = vmatprep.mubr.f32.mxu0 0.0
          %1022 = vmatmul.mubr.f32.gmra.mrb[0].mxu0 %v694
          %v1023 = vpop.f32.mrb[0].mxu0
          %v1024 = vadd.f32 %v879, %v1023
          %v1025 = vpop.f32.mrb[0].mxu0
          %1026 = vmatprep.mubr.f32.mxu0 0.0
          %1027 = vmatmul.mubr.f32.gmra.mrb[0].mxu0 %v697
          %v1028 = vpop.f32.mrb[0].mxu0
          %v1029 = vadd.f32 %v884, %v1028
          %v1030 = vpop.f32.mrb[0].mxu0
          %1031 = vmatprep.mubr.f32.mxu0 0.0
          %1032 = vmatmul.mubr.f32.gmra.mrb[0].mxu0 %v700
          %v1033 = vpop.f32.mrb[0].mxu0
          %v1034 = vadd.f32 %v889, %v1033
          %v1035 = vpop.f32.mrb[0].mxu0
          %1036 = vmatprep.mubr.f32.mxu0 0.0
          %1037 = vmatmul.mubr.f32.gmra.mrb[0].mxu0 %v703
          %v1038 = vpop.f32.mrb[0].mxu0
          %v1039 = vadd.f32 %v894, %v1038
          %v1040 = vpop.f32.mrb[0].mxu0
          %1041 = vdwg.mxu0
          %v1042 = vld [vmem:[#allocation7 + $0x10] sm:$0xff]
          %v1043 = vld [vmem:[#allocation7 + $0x28] sm:$0xff]
          %v1044 = vld [vmem:[#allocation7 + $0x40] sm:$0xff]
          %v1045 = vld [vmem:[#allocation7 + $0x58] sm:$0xff]
          %v1046 = vld [vmem:[#allocation7 + $0x70] sm:$0xff]
          %v1047 = vld [vmem:[#allocation7 + $0x88] sm:$0xff]
          %v1048 = vld [vmem:[#allocation7 + $0xa0] sm:$0xff]
          %v1049 = vld [vmem:[#allocation7 + $0xb8] sm:$0xff]
          %v1050 = vld [vmem:[#allocation7 + $0xd0] sm:$0xff]
          %v1051 = vld [vmem:[#allocation7 + $0xe8] sm:$0xff]
          %v1052 = vld [vmem:[#allocation7 + $0x100] sm:$0xff]
          %v1053 = vld [vmem:[#allocation7 + $0x118] sm:$0xff]
          %v1054 = vld [vmem:[#allocation7 + $0x130] sm:$0xff]
          %v1055 = vld [vmem:[#allocation7 + $0x148] sm:$0xff]
          %v1056 = vld [vmem:[#allocation7 + $0x160] sm:$0xff]
          %v1057 = vld [vmem:[#allocation7 + $0x178] sm:$0xff]
          %v1058 = vld [vmem:[#allocation7 + $0x190] sm:$0xff]
          %v1059 = vld [vmem:[#allocation7 + $0x1a8] sm:$0xff]
          %v1060 = vld [vmem:[#allocation7 + $0x1c0] sm:$0xff]
          %v1061 = vld [vmem:[#allocation7 + $0x1d8] sm:$0xff]
          %v1062 = vld [vmem:[#allocation7 + $0x1f0] sm:$0xff]
          %v1063 = vld [vmem:[#allocation7 + $0x208] sm:$0xff]
          %v1064 = vld [vmem:[#allocation7 + $0x220] sm:$0xff]
          %v1065 = vld [vmem:[#allocation7 + $0x238] sm:$0xff]
          %v1066 = vld [vmem:[#allocation7 + $0x250] sm:$0xff]
          %v1067 = vld [vmem:[#allocation7 + $0x268] sm:$0xff]
          %v1068 = vld [vmem:[#allocation7 + $0x280] sm:$0xff]
          %v1069 = vld [vmem:[#allocation7 + $0x298] sm:$0xff]
          %v1070 = vld [vmem:[#allocation7 + $0x2b0] sm:$0xff]
          %v1071 = vld [vmem:[#allocation7 + $0x2c8] sm:$0xff]
          %v1072 = vld [vmem:[#allocation7 + $0x2e0] sm:$0xff]
          %v1073 = vld [vmem:[#allocation7 + $0x2f8] sm:$0xff]
          %v1074 = vld [vmem:[#allocation7 + $0x310] sm:$0xff]
          %v1075 = vld [vmem:[#allocation7 + $0x328] sm:$0xff]
          %v1076 = vld [vmem:[#allocation7 + $0x340] sm:$0xff]
          %v1077 = vld [vmem:[#allocation7 + $0x358] sm:$0xff]
          %v1078 = vld [vmem:[#allocation7 + $0x370] sm:$0xff]
          %v1079 = vld [vmem:[#allocation7 + $0x388] sm:$0xff]
          %v1080 = vld [vmem:[#allocation7 + $0x3a0] sm:$0xff]
          %v1081 = vld [vmem:[#allocation7 + $0x3b8] sm:$0xff]
          %v1082 = vld [vmem:[#allocation7 + $0x3d0] sm:$0xff]
          %v1083 = vld [vmem:[#allocation7 + $0x3e8] sm:$0xff]
          %v1084 = vld [vmem:[#allocation7 + $0x400] sm:$0xff]
          %v1085 = vld [vmem:[#allocation7 + $0x418] sm:$0xff]
          %v1086 = vld [vmem:[#allocation7 + $0x430] sm:$0xff]
          %v1087 = vld [vmem:[#allocation7 + $0x448] sm:$0xff]
          %v1088 = vld [vmem:[#allocation7 + $0x460] sm:$0xff]
          %v1089 = vld [vmem:[#allocation7 + $0x478] sm:$0xff]
          %1090 = vmatprep.subr.mxu0 0.0
          %1091 = vmatpush1.msra.mxu0 %v1042
          %1092 = vmatprep.subr.mxu0 0.0
          %1093 = vmatpush1.msra.mxu0 %v1043
          %1094 = vmatprep.subr.mxu0 0.0
          %1095 = vmatpush1.msra.mxu0 %v1044
          %1096 = vmatprep.subr.mxu0 0.0
          %1097 = vmatpush1.msra.mxu0 %v1045
          %1098 = vmatprep.subr.mxu0 0.0
          %1099 = vmatpush1.msra.mxu0 %v1046
          %1100 = vmatprep.subr.mxu0 0.0
          %1101 = vmatpush1.msra.mxu0 %v1047
          %1102 = vmatprep.subr.mxu0 0.0
          %1103 = vmatpush1.msra.mxu0 %v1048
          %1104 = vmatprep.subr.mxu0 0.0
          %1105 = vmatpush1.msra.mxu0 %v1049
          %1106 = vmatprep.subr.mxu0 0.0
          %1107 = vmatpush1.msra.mxu0 %v1050
          %1108 = vmatprep.subr.mxu0 0.0
          %1109 = vmatpush1.msra.mxu0 %v1051
          %1110 = vmatprep.subr.mxu0 0.0
          %1111 = vmatpush1.msra.mxu0 %v1052
          %1112 = vmatprep.subr.mxu0 0.0
          %1113 = vmatpush1.msra.mxu0 %v1053
          %1114 = vmatprep.subr.mxu0 0.0
          %1115 = vmatpush1.msra.mxu0 %v1054
          %1116 = vmatprep.subr.mxu0 0.0
          %1117 = vmatpush1.msra.mxu0 %v1055
          %1118 = vmatprep.subr.mxu0 0.0
          %1119 = vmatpush1.msra.mxu0 %v1056
          %1120 = vmatprep.subr.mxu0 0.0
          %1121 = vmatpush1.msra.mxu0 %v1057
          %1122 = vmatprep.subr.mxu0 0.0
          %1123 = vmatpush1.msra.mxu0 %v1058
          %1124 = vmatprep.subr.mxu0 0.0
          %1125 = vmatpush1.msra.mxu0 %v1059
          %1126 = vmatprep.subr.mxu0 0.0
          %1127 = vmatpush1.msra.mxu0 %v1060
          %1128 = vmatprep.subr.mxu0 0.0
          %1129 = vmatpush1.msra.mxu0 %v1061
          %1130 = vmatprep.subr.mxu0 0.0
          %1131 = vmatpush1.msra.mxu0 %v1062
          %1132 = vmatprep.subr.mxu0 0.0
          %1133 = vmatpush1.msra.mxu0 %v1063
          %1134 = vmatprep.subr.mxu0 0.0
          %1135 = vmatpush1.msra.mxu0 %v1064
          %1136 = vmatprep.subr.mxu0 0.0
          %1137 = vmatpush1.msra.mxu0 %v1065
          %1138 = vmatprep.subr.mxu0 0.0
          %1139 = vmatpush1.msra.mxu0 %v1066
          %1140 = vmatprep.subr.mxu0 0.0
          %1141 = vmatpush1.msra.mxu0 %v1067
          %1142 = vmatprep.subr.mxu0 0.0
          %1143 = vmatpush1.msra.mxu0 %v1068
          %1144 = vmatprep.subr.mxu0 0.0
          %1145 = vmatpush1.msra.mxu0 %v1069
          %1146 = vmatprep.subr.mxu0 0.0
          %1147 = vmatpush1.msra.mxu0 %v1070
          %1148 = vmatprep.subr.mxu0 0.0
          %1149 = vmatpush1.msra.mxu0 %v1071
          %1150 = vmatprep.subr.mxu0 0.0
          %1151 = vmatpush1.msra.mxu0 %v1072
          %1152 = vmatprep.subr.mxu0 0.0
          %1153 = vmatpush1.msra.mxu0 %v1073
          %1154 = vmatprep.mubr.f32.mxu0 %v657
          %1155 = vmatmul.mubr.f32.gmra.mrb[0].mxu0 %v656
          %v1156 = vpop.f32.mrb[0].mxu0
          %v1157 = vadd.f32 0.0, %v1156
          %v1158 = vpop.f32.mrb[0].mxu0
          %1159 = vmatprep.mubr.f32.mxu0 %v660
          %1160 = vmatmul.mubr.f32.gmra.mrb[0].mxu0 %v659
          %v1161 = vpop.f32.mrb[0].mxu0
          %v1162 = vadd.f32 0.0, %v1161
          %v1163 = vpop.f32.mrb[0].mxu0
          %1164 = vmatprep.mubr.f32.mxu0 %v663
          %1165 = vmatmul.mubr.f32.gmra.mrb[0].mxu0 %v662
          %v1166 = vpop.f32.mrb[0].mxu0
          %v1167 = vadd.f32 0.0, %v1166
          %v1168 = vpop.f32.mrb[0].mxu0
          %1169 = vmatprep.mubr.f32.mxu0 %v666
          %1170 = vmatmul.mubr.f32.gmra.mrb[0].mxu0 %v665
          %v1171 = vpop.f32.mrb[0].mxu0
          %v1172 = vadd.f32 0.0, %v1171
          %v1173 = vpop.f32.mrb[0].mxu0
          %1174 = vmatprep.mubr.f32.mxu0 %v669
          %1175 = vmatmul.mubr.f32.gmra.mrb[0].mxu0 %v668
          %v1176 = vpop.f32.mrb[0].mxu0
          %v1177 = vadd.f32 0.0, %v1176
          %v1178 = vpop.f32.mrb[0].mxu0
          %1179 = vmatprep.mubr.f32.mxu0 %v672
          %1180 = vmatmul.mubr.f32.gmra.mrb[0].mxu0 %v671
          %v1181 = vpop.f32.mrb[0].mxu0
          %v1182 = vadd.f32 0.0, %v1181
          %v1183 = vpop.f32.mrb[0].mxu0
          %1184 = vmatprep.mubr.f32.mxu0 %v675
          %1185 = vmatmul.mubr.f32.gmra.mrb[0].mxu0 %v674
          %v1186 = vpop.f32.mrb[0].mxu0
          %v1187 = vadd.f32 0.0, %v1186
          %v1188 = vpop.f32.mrb[0].mxu0
          %1189 = vmatprep.mubr.f32.mxu0 %v678
          %1190 = vmatmul.mubr.f32.gmra.mrb[0].mxu0 %v677
          %v1191 = vpop.f32.mrb[0].mxu0
          %v1192 = vadd.f32 0.0, %v1191
          %v1193 = vpop.f32.mrb[0].mxu0
          %1194 = vmatprep.mubr.f32.mxu0 %v681
          %1195 = vmatmul.mubr.f32.gmra.mrb[0].mxu0 %v680
          %v1196 = vpop.f32.mrb[0].mxu0
          %v1197 = vadd.f32 0.0, %v1196
          %v1198 = vpop.f32.mrb[0].mxu0
          %1199 = vmatprep.mubr.f32.mxu0 %v684
          %1200 = vmatmul.mubr.f32.gmra.mrb[0].mxu0 %v683
          %v1201 = vpop.f32.mrb[0].mxu0
          %v1202 = vadd.f32 0.0, %v1201
          %v1203 = vpop.f32.mrb[0].mxu0
          %1204 = vmatprep.mubr.f32.mxu0 %v687
          %1205 = vmatmul.mubr.f32.gmra.mrb[0].mxu0 %v686
          %v1206 = vpop.f32.mrb[0].mxu0
          %v1207 = vadd.f32 0.0, %v1206
          %v1208 = vpop.f32.mrb[0].mxu0
          %1209 = vmatprep.mubr.f32.mxu0 %v690
          %1210 = vmatmul.mubr.f32.gmra.mrb[0].mxu0 %v689
          %v1211 = vpop.f32.mrb[0].mxu0
          %v1212 = vadd.f32 0.0, %v1211
          %v1213 = vpop.f32.mrb[0].mxu0
          %1214 = vmatprep.mubr.f32.mxu0 %v693
          %1215 = vmatmul.mubr.f32.gmra.mrb[0].mxu0 %v692
          %v1216 = vpop.f32.mrb[0].mxu0
          %v1217 = vadd.f32 0.0, %v1216
          %v1218 = vpop.f32.mrb[0].mxu0
          %1219 = vmatprep.mubr.f32.mxu0 %v696
          %1220 = vmatmul.mubr.f32.gmra.mrb[0].mxu0 %v695
          %v1221 = vpop.f32.mrb[0].mxu0
          %v1222 = vadd.f32 0.0, %v1221
          %v1223 = vpop.f32.mrb[0].mxu0
          %1224 = vmatprep.mubr.f32.mxu0 %v699
          %1225 = vmatmul.mubr.f32.gmra.mrb[0].mxu0 %v698
          %v1226 = vpop.f32.mrb[0].mxu0
          %v1227 = vadd.f32 0.0, %v1226
          %v1228 = vpop.f32.mrb[0].mxu0
          %1229 = vmatprep.mubr.f32.mxu0 %v702
          %1230 = vmatmul.mubr.f32.gmra.mrb[0].mxu0 %v701
          %v1231 = vpop.f32.mrb[0].mxu0
          %v1232 = vadd.f32 0.0, %v1231
          %v1233 = vpop.f32.mrb[0].mxu0
          %1234 = vdwg.mxu0
          %1235 = vmatprep.subr.mxu0 0.0
          %1236 = vmatpush1.msra.mxu0 %v1074
          %1237 = vmatprep.subr.mxu0 0.0
          %1238 = vmatpush1.msra.mxu0 %v1075
          %1239 = vmatprep.subr.mxu0 0.0
          %1240 = vmatpush1.msra.mxu0 %v1076
          %1241 = vmatprep.subr.mxu0 0.0
          %1242 = vmatpush1.msra.mxu0 %v1077
          %1243 = vmatprep.subr.mxu0 0.0
          %1244 = vmatpush1.msra.mxu0 %v1078
          %1245 = vmatprep.subr.mxu0 0.0
          %1246 = vmatpush1.msra.mxu0 %v1079
          %1247 = vmatprep.subr.mxu0 0.0
          %1248 = vmatpush1.msra.mxu0 %v1080
          %1249 = vmatprep.subr.mxu0 0.0
          %1250 = vmatpush1.msra.mxu0 %v1081
          %1251 = vmatprep.subr.mxu0 0.0
          %1252 = vmatpush1.msra.mxu0 %v1082
          %1253 = vmatprep.subr.mxu0 0.0
          %1254 = vmatpush1.msra.mxu0 %v1083
          %1255 = vmatprep.subr.mxu0 0.0
          %1256 = vmatpush1.msra.mxu0 %v1084
          %1257 = vmatprep.subr.mxu0 0.0
          %1258 = vmatpush1.msra.mxu0 %v1085
          %1259 = vmatprep.subr.mxu0 0.0
          %1260 = vmatpush1.msra.mxu0 %v1086
          %1261 = vmatprep.subr.mxu0 0.0
          %1262 = vmatpush1.msra.mxu0 %v1087
          %1263 = vmatprep.subr.mxu0 0.0
          %1264 = vmatpush1.msra.mxu0 %v1088
          %1265 = vmatprep.subr.mxu0 0.0
          %1266 = vmatpush1.msra.mxu0 %v1089
          %1267 = vmatprep.subr.mxu0 0.0
          %1268 = vmatpush1.msra.mxu0 0.0
          %1269 = vmatprep.subr.mxu0 0.0
          %1270 = vmatpush1.msra.mxu0 0.0
          %1271 = vmatprep.subr.mxu0 0.0
          %1272 = vmatpush1.msra.mxu0 0.0
          %1273 = vmatprep.subr.mxu0 0.0
          %1274 = vmatpush1.msra.mxu0 0.0
          %1275 = vmatprep.subr.mxu0 0.0
          %1276 = vmatpush1.msra.mxu0 0.0
          %1277 = vmatprep.subr.mxu0 0.0
          %1278 = vmatpush1.msra.mxu0 0.0
          %1279 = vmatprep.subr.mxu0 0.0
          %1280 = vmatpush1.msra.mxu0 0.0
          %1281 = vmatprep.subr.mxu0 0.0
          %1282 = vmatpush1.msra.mxu0 0.0
          %1283 = vmatprep.subr.mxu0 0.0
          %1284 = vmatpush1.msra.mxu0 0.0
          %1285 = vmatprep.subr.mxu0 0.0
          %1286 = vmatpush1.msra.mxu0 0.0
          %1287 = vmatprep.subr.mxu0 0.0
          %1288 = vmatpush1.msra.mxu0 0.0
          %1289 = vmatprep.subr.mxu0 0.0
          %1290 = vmatpush1.msra.mxu0 0.0
          %1291 = vmatprep.subr.mxu0 0.0
          %1292 = vmatpush1.msra.mxu0 0.0
          %1293 = vmatprep.subr.mxu0 0.0
          %1294 = vmatpush1.msra.mxu0 0.0
          %1295 = vmatprep.subr.mxu0 0.0
          %1296 = vmatpush1.msra.mxu0 0.0
          %1297 = vmatprep.subr.mxu0 0.0
          %1298 = vmatpush1.msra.mxu0 0.0
          %1299 = vmatprep.mubr.f32.mxu0 0.0
          %1300 = vmatmul.mubr.f32.gmra.mrb[0].mxu0 %v658
          %v1301 = vpop.f32.mrb[0].mxu0
          %v1302 = vadd.f32 %v1157, %v1301
          %v1303 = vpop.f32.mrb[0].mxu0
          %1304 = vmatprep.mubr.f32.mxu0 0.0
          %1305 = vmatmul.mubr.f32.gmra.mrb[0].mxu0 %v661
          %v1306 = vpop.f32.mrb[0].mxu0
          %v1307 = vadd.f32 %v1162, %v1306
          %v1308 = vpop.f32.mrb[0].mxu0
          %1309 = vmatprep.mubr.f32.mxu0 0.0
          %1310 = vmatmul.mubr.f32.gmra.mrb[0].mxu0 %v664
          %v1311 = vpop.f32.mrb[0].mxu0
          %v1312 = vadd.f32 %v1167, %v1311
          %v1313 = vpop.f32.mrb[0].mxu0
          %1314 = vmatprep.mubr.f32.mxu0 0.0
          %1315 = vmatmul.mubr.f32.gmra.mrb[0].mxu0 %v667
          %v1316 = vpop.f32.mrb[0].mxu0
          %v1317 = vadd.f32 %v1172, %v1316
          %v1318 = vpop.f32.mrb[0].mxu0
          %1319 = vmatprep.mubr.f32.mxu0 0.0
          %1320 = vmatmul.mubr.f32.gmra.mrb[0].mxu0 %v670
          %v1321 = vpop.f32.mrb[0].mxu0
          %v1322 = vadd.f32 %v1177, %v1321
          %v1323 = vpop.f32.mrb[0].mxu0
          %1324 = vmatprep.mubr.f32.mxu0 0.0
          %1325 = vmatmul.mubr.f32.gmra.mrb[0].mxu0 %v673
          %v1326 = vpop.f32.mrb[0].mxu0
          %v1327 = vadd.f32 %v1182, %v1326
          %v1328 = vpop.f32.mrb[0].mxu0
          %1329 = vmatprep.mubr.f32.mxu0 0.0
          %1330 = vmatmul.mubr.f32.gmra.mrb[0].mxu0 %v676
          %v1331 = vpop.f32.mrb[0].mxu0
          %v1332 = vadd.f32 %v1187, %v1331
          %v1333 = vpop.f32.mrb[0].mxu0
          %1334 = vmatprep.mubr.f32.mxu0 0.0
          %1335 = vmatmul.mubr.f32.gmra.mrb[0].mxu0 %v679
          %v1336 = vpop.f32.mrb[0].mxu0
          %v1337 = vadd.f32 %v1192, %v1336
          %v1338 = vpop.f32.mrb[0].mxu0
          %1339 = vmatprep.mubr.f32.mxu0 0.0
          %1340 = vmatmul.mubr.f32.gmra.mrb[0].mxu0 %v682
          %v1341 = vpop.f32.mrb[0].mxu0
          %v1342 = vadd.f32 %v1197, %v1341
          %v1343 = vpop.f32.mrb[0].mxu0
          %1344 = vmatprep.mubr.f32.mxu0 0.0
          %1345 = vmatmul.mubr.f32.gmra.mrb[0].mxu0 %v685
          %v1346 = vpop.f32.mrb[0].mxu0
          %v1347 = vadd.f32 %v1202, %v1346
          %v1348 = vpop.f32.mrb[0].mxu0
          %1349 = vmatprep.mubr.f32.mxu0 0.0
          %1350 = vmatmul.mubr.f32.gmra.mrb[0].mxu0 %v688
          %v1351 = vpop.f32.mrb[0].mxu0
          %v1352 = vadd.f32 %v1207, %v1351
          %v1353 = vpop.f32.mrb[0].mxu0
          %1354 = vmatprep.mubr.f32.mxu0 0.0
          %1355 = vmatmul.mubr.f32.gmra.mrb[0].mxu0 %v691
          %v1356 = vpop.f32.mrb[0].mxu0
          %v1357 = vadd.f32 %v1212, %v1356
          %v1358 = vpop.f32.mrb[0].mxu0
          %1359 = vmatprep.mubr.f32.mxu0 0.0
          %1360 = vmatmul.mubr.f32.gmra.mrb[0].mxu0 %v694
          %v1361 = vpop.f32.mrb[0].mxu0
          %v1362 = vadd.f32 %v1217, %v1361
          %v1363 = vpop.f32.mrb[0].mxu0
          %1364 = vmatprep.mubr.f32.mxu0 0.0
          %1365 = vmatmul.mubr.f32.gmra.mrb[0].mxu0 %v697
          %v1366 = vpop.f32.mrb[0].mxu0
          %v1367 = vadd.f32 %v1222, %v1366
          %v1368 = vpop.f32.mrb[0].mxu0
          %1369 = vmatprep.mubr.f32.mxu0 0.0
          %1370 = vmatmul.mubr.f32.gmra.mrb[0].mxu0 %v700
          %v1371 = vpop.f32.mrb[0].mxu0
          %v1372 = vadd.f32 %v1227, %v1371
          %v1373 = vpop.f32.mrb[0].mxu0
          %1374 = vmatprep.mubr.f32.mxu0 0.0
          %1375 = vmatmul.mubr.f32.gmra.mrb[0].mxu0 %v703
          %v1376 = vpop.f32.mrb[0].mxu0
          %v1377 = vadd.f32 %v1232, %v1376
          %v1378 = vpop.f32.mrb[0].mxu0
          %1379 = vdwg.mxu0
          %1380 = vmatprep.subr.mxu0 0.0
          %1381 = vmatpush1.xpose.msra.mxu0 %v964
          %1382 = vmatprep.subr.mxu0 0.0
          %1383 = vmatpush1.xpose.msra.mxu0 %v969
          %1384 = vmatprep.subr.mxu0 0.0
          %1385 = vmatpush1.xpose.msra.mxu0 %v974
          %1386 = vmatprep.subr.mxu0 0.0
          %1387 = vmatpush1.xpose.msra.mxu0 %v979
          %1388 = vmatprep.subr.mxu0 0.0
          %1389 = vmatpush1.xpose.msra.mxu0 %v984
          %1390 = vmatprep.subr.mxu0 0.0
          %1391 = vmatpush1.xpose.msra.mxu0 %v989
          %1392 = vmatprep.subr.mxu0 0.0
          %1393 = vmatpush1.xpose.msra.mxu0 %v994
          %1394 = vmatprep.subr.mxu0 0.0
          %1395 = vmatpush1.xpose.msra.mxu0 %v999
          %1396 = vmatprep.subr.mxu0 0.0
          %1397 = vmatpush1.xpose.msra.mxu0 %v1004
          %1398 = vmatprep.subr.mxu0 0.0
          %1399 = vmatpush1.xpose.msra.mxu0 %v1009
          %1400 = vmatprep.subr.mxu0 0.0
          %1401 = vmatpush1.xpose.msra.mxu0 %v1014
          %1402 = vmatprep.subr.mxu0 0.0
          %1403 = vmatpush1.xpose.msra.mxu0 %v1019
          %1404 = vmatprep.subr.mxu0 0.0
          %1405 = vmatpush1.xpose.msra.mxu0 %v1024
          %1406 = vmatprep.subr.mxu0 0.0
          %1407 = vmatpush1.xpose.msra.mxu0 %v1029
          %1408 = vmatprep.subr.mxu0 0.0
          %1409 = vmatpush1.xpose.msra.mxu0 %v1034
          %1410 = vmatprep.subr.mxu0 0.0
          %1411 = vmatpush1.xpose.msra.mxu0 %v1039
          %1412 = vmatprep.subr.mxu0 0.0
          %1413 = vmatpush1.xpose.msra.mxu0 0.0
          %1414 = vmatprep.subr.mxu0 0.0
          %1415 = vmatpush1.xpose.msra.mxu0 0.0
          %1416 = vmatprep.subr.mxu0 0.0
          %1417 = vmatpush1.xpose.msra.mxu0 0.0
          %1418 = vmatprep.subr.mxu0 0.0
          %1419 = vmatpush1.xpose.msra.mxu0 0.0
          %1420 = vmatprep.subr.mxu0 0.0
          %1421 = vmatpush1.xpose.msra.mxu0 0.0
          %1422 = vmatprep.subr.mxu0 0.0
          %1423 = vmatpush1.xpose.msra.mxu0 0.0
          %1424 = vmatprep.subr.mxu0 0.0
          %1425 = vmatpush1.xpose.msra.mxu0 0.0
          %1426 = vmatprep.subr.mxu0 0.0
          %1427 = vmatpush1.xpose.msra.mxu0 0.0
          %1428 = vmatprep.subr.mxu0 0.0
          %1429 = vmatpush1.xpose.msra.mxu0 0.0
          %1430 = vmatprep.subr.mxu0 0.0
          %1431 = vmatpush1.xpose.msra.mxu0 0.0
          %1432 = vmatprep.subr.mxu0 0.0
          %1433 = vmatpush1.xpose.msra.mxu0 0.0
          %1434 = vmatprep.subr.mxu0 0.0
          %1435 = vmatpush1.xpose.msra.mxu0 0.0
          %1436 = vmatprep.subr.mxu0 0.0
          %1437 = vmatpush1.xpose.msra.mxu0 0.0
          %1438 = vmatprep.subr.mxu0 0.0
          %1439 = vmatpush1.xpose.msra.mxu0 0.0
          %1440 = vmatprep.subr.mxu0 0.0
          %1441 = vmatpush1.xpose.msra.mxu0 0.0
          %1442 = vmatprep.subr.mxu0 0.0
          %1443 = vmatpush1.xpose.msra.mxu0 0.0
          %1444 = vmatprep.mubr.f32.mxu0 0.0
          %1445 = vmatmul.mubr.f32.gmra.mrb[0].mxu0 %v565
          %v1446 = vpop.f32.mrb[0].mxu0
          %v1447 = vadd.f32 0.0, %v1446
          %v1448 = vpop.f32.mrb[0].mxu0
          %1449 = vmatprep.mubr.f32.mxu0 0.0
          %1450 = vmatmul.mubr.f32.gmra.mrb[0].mxu0 %v570
          %v1451 = vpop.f32.mrb[0].mxu0
          %v1452 = vadd.f32 0.0, %v1451
          %v1453 = vpop.f32.mrb[0].mxu0
          %1454 = vmatprep.mubr.f32.mxu0 0.0
          %1455 = vmatmul.mubr.f32.gmra.mrb[0].mxu0 %v575
          %v1456 = vpop.f32.mrb[0].mxu0
          %v1457 = vadd.f32 0.0, %v1456
          %v1458 = vpop.f32.mrb[0].mxu0
          %1459 = vmatprep.mubr.f32.mxu0 0.0
          %1460 = vmatmul.mubr.f32.gmra.mrb[0].mxu0 %v580
          %v1461 = vpop.f32.mrb[0].mxu0
          %v1462 = vadd.f32 0.0, %v1461
          %v1463 = vpop.f32.mrb[0].mxu0
          %1464 = vmatprep.mubr.f32.mxu0 0.0
          %1465 = vmatmul.mubr.f32.gmra.mrb[0].mxu0 %v585
          %v1466 = vpop.f32.mrb[0].mxu0
          %v1467 = vadd.f32 0.0, %v1466
          %v1468 = vpop.f32.mrb[0].mxu0
          %1469 = vmatprep.mubr.f32.mxu0 0.0
          %1470 = vmatmul.mubr.f32.gmra.mrb[0].mxu0 %v590
          %v1471 = vpop.f32.mrb[0].mxu0
          %v1472 = vadd.f32 0.0, %v1471
          %v1473 = vpop.f32.mrb[0].mxu0
          %1474 = vmatprep.mubr.f32.mxu0 0.0
          %1475 = vmatmul.mubr.f32.gmra.mrb[0].mxu0 %v595
          %v1476 = vpop.f32.mrb[0].mxu0
          %v1477 = vadd.f32 0.0, %v1476
          %v1478 = vpop.f32.mrb[0].mxu0
          %1479 = vmatprep.mubr.f32.mxu0 0.0
          %1480 = vmatmul.mubr.f32.gmra.mrb[0].mxu0 %v600
          %v1481 = vpop.f32.mrb[0].mxu0
          %v1482 = vadd.f32 0.0, %v1481
          %v1483 = vpop.f32.mrb[0].mxu0
          %1484 = vmatprep.mubr.f32.mxu0 0.0
          %1485 = vmatmul.mubr.f32.gmra.mrb[0].mxu0 %v605
          %v1486 = vpop.f32.mrb[0].mxu0
          %v1487 = vadd.f32 0.0, %v1486
          %v1488 = vpop.f32.mrb[0].mxu0
          %1489 = vmatprep.mubr.f32.mxu0 0.0
          %1490 = vmatmul.mubr.f32.gmra.mrb[0].mxu0 %v610
          %v1491 = vpop.f32.mrb[0].mxu0
          %v1492 = vadd.f32 0.0, %v1491
          %v1493 = vpop.f32.mrb[0].mxu0
          %1494 = vmatprep.mubr.f32.mxu0 0.0
          %1495 = vmatmul.mubr.f32.gmra.mrb[0].mxu0 %v615
          %v1496 = vpop.f32.mrb[0].mxu0
          %v1497 = vadd.f32 0.0, %v1496
          %v1498 = vpop.f32.mrb[0].mxu0
          %1499 = vmatprep.mubr.f32.mxu0 0.0
          %1500 = vmatmul.mubr.f32.gmra.mrb[0].mxu0 %v620
          %v1501 = vpop.f32.mrb[0].mxu0
          %v1502 = vadd.f32 0.0, %v1501
          %v1503 = vpop.f32.mrb[0].mxu0
          %1504 = vmatprep.mubr.f32.mxu0 0.0
          %1505 = vmatmul.mubr.f32.gmra.mrb[0].mxu0 %v625
          %v1506 = vpop.f32.mrb[0].mxu0
          %v1507 = vadd.f32 0.0, %v1506
          %v1508 = vpop.f32.mrb[0].mxu0
          %1509 = vmatprep.mubr.f32.mxu0 0.0
          %1510 = vmatmul.mubr.f32.gmra.mrb[0].mxu0 %v630
          %v1511 = vpop.f32.mrb[0].mxu0
          %v1512 = vadd.f32 0.0, %v1511
          %v1513 = vpop.f32.mrb[0].mxu0
          %1514 = vmatprep.mubr.f32.mxu0 0.0
          %1515 = vmatmul.mubr.f32.gmra.mrb[0].mxu0 %v635
          %v1516 = vpop.f32.mrb[0].mxu0
          %v1517 = vadd.f32 0.0, %v1516
          %v1518 = vpop.f32.mrb[0].mxu0
          %1519 = vmatprep.mubr.f32.mxu0 0.0
          %1520 = vmatmul.mubr.f32.gmra.mrb[0].mxu0 %v640
          %v1521 = vpop.f32.mrb[0].mxu0
          %v1522 = vadd.f32 0.0, %v1521
          %v1523 = vpop.f32.mrb[0].mxu0
          %1524 = vdwg.mxu0
          %v1525 = vlaneseq
          %v1526 = vshrl.u32 %v1525, 7
          %v1527 = vadd.s32 %v1526, 8
          %v1528 = vadd.s32 %v1526, 16
          %v1529 = vadd.s32 %v1526, 24
          %v1530 = vadd.s32 %v1526, 32
          %v1531 = vadd.s32 %v1526, 40
          %v1532 = vadd.s32 %v1526, 48
          %v1533 = vadd.s32 %v1526, 56
          %v1534 = vadd.s32 %v1526, 64
          %v1535 = vadd.s32 %v1526, 72
          %v1536 = vadd.s32 %v1526, 80
          %v1537 = vadd.s32 %v1526, 88
          %v1538 = vadd.s32 %v1526, 96
          %v1539 = vadd.s32 %v1526, 104
          %v1540 = vadd.s32 %v1526, 112
          %v1541 = vadd.s32 %v1526, 120
          %v1542 = vstv %s251
          %v1543 = vadd.s32 %v1542, %v1526
          %v1544 = vadd.s32 %v1542, %v1527
          %v1545 = vadd.s32 %v1542, %v1528
          %v1546 = vadd.s32 %v1542, %v1529
          %v1547 = vadd.s32 %v1542, %v1530
          %v1548 = vadd.s32 %v1542, %v1531
          %v1549 = vadd.s32 %v1542, %v1532
          %v1550 = vadd.s32 %v1542, %v1533
          %v1551 = vadd.s32 %v1542, %v1534
          %v1552 = vadd.s32 %v1542, %v1535
          %v1553 = vadd.s32 %v1542, %v1536
          %v1554 = vadd.s32 %v1542, %v1537
          %v1555 = vadd.s32 %v1542, %v1538
          %v1556 = vadd.s32 %v1542, %v1539
          %v1557 = vadd.s32 %v1542, %v1540
          %v1558 = vadd.s32 %v1542, %v1541
          %v1559 = vlaneseq
          %v1560 = vand.u32 %v1559, 127
          %v1561 = vstv %s650
          %v1562 = vadd.s32 %v1561, %v1560
          %vm1563 = vcmp.le.s32.totalorder %v1562, %v1543
          %vm1564 = vcmp.le.s32.totalorder %v1562, %v1544
          %vm1565 = vcmp.le.s32.totalorder %v1562, %v1545
          %vm1566 = vcmp.le.s32.totalorder %v1562, %v1546
          %vm1567 = vcmp.le.s32.totalorder %v1562, %v1547
          %vm1568 = vcmp.le.s32.totalorder %v1562, %v1548
          %vm1569 = vcmp.le.s32.totalorder %v1562, %v1549
          %vm1570 = vcmp.le.s32.totalorder %v1562, %v1550
          %vm1571 = vcmp.le.s32.totalorder %v1562, %v1551
          %vm1572 = vcmp.le.s32.totalorder %v1562, %v1552
          %vm1573 = vcmp.le.s32.totalorder %v1562, %v1553
          %vm1574 = vcmp.le.s32.totalorder %v1562, %v1554
          %vm1575 = vcmp.le.s32.totalorder %v1562, %v1555
          %vm1576 = vcmp.le.s32.totalorder %v1562, %v1556
          %vm1577 = vcmp.le.s32.totalorder %v1562, %v1557
          %vm1578 = vcmp.le.s32.totalorder %v1562, %v1558
          %v1579 = vsel %vm1563, %v1447, -inf
          %v1580 = vsel %vm1564, %v1452, -inf
          %v1581 = vsel %vm1565, %v1457, -inf
          %v1582 = vsel %vm1566, %v1462, -inf
          %v1583 = vsel %vm1567, %v1467, -inf
          %v1584 = vsel %vm1568, %v1472, -inf
          %v1585 = vsel %vm1569, %v1477, -inf
          %v1586 = vsel %vm1570, %v1482, -inf
          %v1587 = vsel %vm1571, %v1487, -inf
          %v1588 = vsel %vm1572, %v1492, -inf
          %v1589 = vsel %vm1573, %v1497, -inf
          %v1590 = vsel %vm1574, %v1502, -inf
          %v1591 = vsel %vm1575, %v1507, -inf
          %v1592 = vsel %vm1576, %v1512, -inf
          %v1593 = vsel %vm1577, %v1517, -inf
          %v1594 = vsel %vm1578, %v1522, -inf
          %v1595 = vld [vmem:[#allocation2] sm:$0xff]
          %v1596 = vld [vmem:[#allocation2 + $0x8] sm:$0xff]
          %v1597 = vld [vmem:[#allocation2 + $0x10] sm:$0xff]
          %v1598 = vld [vmem:[#allocation2 + $0x18] sm:$0xff]
          %v1599 = vld [vmem:[#allocation2 + $0x20] sm:$0xff]
          %v1600 = vld [vmem:[#allocation2 + $0x28] sm:$0xff]
          %v1601 = vld [vmem:[#allocation2 + $0x30] sm:$0xff]
          %v1602 = vld [vmem:[#allocation2 + $0x38] sm:$0xff]
          %v1603 = vld [vmem:[#allocation2 + $0x40] sm:$0xff]
          %v1604 = vld [vmem:[#allocation2 + $0x48] sm:$0xff]
          %v1605 = vld [vmem:[#allocation2 + $0x50] sm:$0xff]
          %v1606 = vld [vmem:[#allocation2 + $0x58] sm:$0xff]
          %v1607 = vld [vmem:[#allocation2 + $0x60] sm:$0xff]
          %v1608 = vld [vmem:[#allocation2 + $0x68] sm:$0xff]
          %v1609 = vld [vmem:[#allocation2 + $0x70] sm:$0xff]
          %v1610 = vld [vmem:[#allocation2 + $0x78] sm:$0xff]
          %1611 = vmax.xlane.f32.xlu0 %v1579
          %v1612 = vpop.xlane.xlu0 %1611
          %1613 = vmax.xlane.f32.xlu0 %v1580
          %v1614 = vpop.xlane.xlu0 %1613
          %1615 = vmax.xlane.f32.xlu0 %v1581
          %v1616 = vpop.xlane.xlu0 %1615
          %1617 = vmax.xlane.f32.xlu0 %v1582
          %v1618 = vpop.xlane.xlu0 %1617
          %1619 = vmax.xlane.f32.xlu0 %v1583
          %v1620 = vpop.xlane.xlu0 %1619
          %1621 = vmax.xlane.f32.xlu0 %v1584
          %v1622 = vpop.xlane.xlu0 %1621
          %1623 = vmax.xlane.f32.xlu0 %v1585
          %v1624 = vpop.xlane.xlu0 %1623
          %1625 = vmax.xlane.f32.xlu0 %v1586
          %v1626 = vpop.xlane.xlu0 %1625
          %1627 = vmax.xlane.f32.xlu0 %v1587
          %v1628 = vpop.xlane.xlu0 %1627
          %1629 = vmax.xlane.f32.xlu0 %v1588
          %v1630 = vpop.xlane.xlu0 %1629
          %1631 = vmax.xlane.f32.xlu0 %v1589
          %v1632 = vpop.xlane.xlu0 %1631
          %1633 = vmax.xlane.f32.xlu0 %v1590
          %v1634 = vpop.xlane.xlu0 %1633
          %1635 = vmax.xlane.f32.xlu0 %v1591
          %v1636 = vpop.xlane.xlu0 %1635
          %1637 = vmax.xlane.f32.xlu0 %v1592
          %v1638 = vpop.xlane.xlu0 %1637
          %1639 = vmax.xlane.f32.xlu0 %v1593
          %v1640 = vpop.xlane.xlu0 %1639
          %1641 = vmax.xlane.f32.xlu0 %v1594
          %v1642 = vpop.xlane.xlu0 %1641
          %v1643 = vmax.f32 %v1595, %v1612
          %v1644 = vmax.f32 %v1596, %v1614
          %v1645 = vmax.f32 %v1597, %v1616
          %v1646 = vmax.f32 %v1598, %v1618
          %v1647 = vmax.f32 %v1599, %v1620
          %v1648 = vmax.f32 %v1600, %v1622
          %v1649 = vmax.f32 %v1601, %v1624
          %v1650 = vmax.f32 %v1602, %v1626
          %v1651 = vmax.f32 %v1603, %v1628
          %v1652 = vmax.f32 %v1604, %v1630
          %v1653 = vmax.f32 %v1605, %v1632
          %v1654 = vmax.f32 %v1606, %v1634
          %v1655 = vmax.f32 %v1607, %v1636
          %v1656 = vmax.f32 %v1608, %v1638
          %v1657 = vmax.f32 %v1609, %v1640
          %v1658 = vmax.f32 %v1610, %v1642
          %v1659 = vsub.f32 %v1595, %v1643
          %v1660 = vsub.f32 %v1596, %v1644
          %v1661 = vsub.f32 %v1597, %v1645
          %v1662 = vsub.f32 %v1598, %v1646
          %v1663 = vsub.f32 %v1599, %v1647
          %v1664 = vsub.f32 %v1600, %v1648
          %v1665 = vsub.f32 %v1601, %v1649
          %v1666 = vsub.f32 %v1602, %v1650
          %v1667 = vsub.f32 %v1603, %v1651
          %v1668 = vsub.f32 %v1604, %v1652
          %v1669 = vsub.f32 %v1605, %v1653
          %v1670 = vsub.f32 %v1606, %v1654
          %v1671 = vsub.f32 %v1607, %v1655
          %v1672 = vsub.f32 %v1608, %v1656
          %v1673 = vsub.f32 %v1609, %v1657
          %v1674 = vsub.f32 %v1610, %v1658
          %v1675 = vmul.f32 %v1659, 1.442695
          %v1676 = vpow.pop %v1675
          %v1677 = vmul.f32 %v1660, 1.442695
          %v1678 = vpow.pop %v1677
          %v1679 = vmul.f32 %v1661, 1.442695
          %v1680 = vpow.pop %v1679
          %v1681 = vmul.f32 %v1662, 1.442695
          %v1682 = vpow.pop %v1681
          %v1683 = vmul.f32 %v1663, 1.442695
          %v1684 = vpow.pop %v1683
          %v1685 = vmul.f32 %v1664, 1.442695
          %v1686 = vpow.pop %v1685
          %v1687 = vmul.f32 %v1665, 1.442695
          %v1688 = vpow.pop %v1687
          %v1689 = vmul.f32 %v1666, 1.442695
          %v1690 = vpow.pop %v1689
          %v1691 = vmul.f32 %v1667, 1.442695
          %v1692 = vpow.pop %v1691
          %v1693 = vmul.f32 %v1668, 1.442695
          %v1694 = vpow.pop %v1693
          %v1695 = vmul.f32 %v1669, 1.442695
          %v1696 = vpow.pop %v1695
          %v1697 = vmul.f32 %v1670, 1.442695
          %v1698 = vpow.pop %v1697
          %v1699 = vmul.f32 %v1671, 1.442695
          %v1700 = vpow.pop %v1699
          %v1701 = vmul.f32 %v1672, 1.442695
          %v1702 = vpow.pop %v1701
          %v1703 = vmul.f32 %v1673, 1.442695
          %v1704 = vpow.pop %v1703
          %v1705 = vmul.f32 %v1674, 1.442695
          %v1706 = vpow.pop %v1705
          %1708 = vset.pattern.permute.xlu0 0
          %1709 = vperm.xlu0 %1708, %v1643
          %v1710 = vpop.permute.xlu0 %1709
          %1713 = vset.pattern.permute.xlu0 0
          %1714 = vperm.xlu0 %1713, %v1644
          %v1715 = vpop.permute.xlu0 %1714
          %1718 = vset.pattern.permute.xlu0 0
          %1719 = vperm.xlu0 %1718, %v1645
          %v1720 = vpop.permute.xlu0 %1719
          %1723 = vset.pattern.permute.xlu0 0
          %1724 = vperm.xlu0 %1723, %v1646
          %v1725 = vpop.permute.xlu0 %1724
          %1728 = vset.pattern.permute.xlu0 0
          %1729 = vperm.xlu0 %1728, %v1647
          %v1730 = vpop.permute.xlu0 %1729
          %1733 = vset.pattern.permute.xlu0 0
          %1734 = vperm.xlu0 %1733, %v1648
          %v1735 = vpop.permute.xlu0 %1734
          %1738 = vset.pattern.permute.xlu0 0
          %1739 = vperm.xlu0 %1738, %v1649
          %v1740 = vpop.permute.xlu0 %1739
          %1743 = vset.pattern.permute.xlu0 0
          %1744 = vperm.xlu0 %1743, %v1650
          %v1745 = vpop.permute.xlu0 %1744
          %1748 = vset.pattern.permute.xlu0 0
          %1749 = vperm.xlu0 %1748, %v1651
          %v1750 = vpop.permute.xlu0 %1749
          %1753 = vset.pattern.permute.xlu0 0
          %1754 = vperm.xlu0 %1753, %v1652
          %v1755 = vpop.permute.xlu0 %1754
          %1758 = vset.pattern.permute.xlu0 0
          %1759 = vperm.xlu0 %1758, %v1653
          %v1760 = vpop.permute.xlu0 %1759
          %1763 = vset.pattern.permute.xlu0 0
          %1764 = vperm.xlu0 %1763, %v1654
          %v1765 = vpop.permute.xlu0 %1764
          %1768 = vset.pattern.permute.xlu0 0
          %1769 = vperm.xlu0 %1768, %v1655
          %v1770 = vpop.permute.xlu0 %1769
          %1773 = vset.pattern.permute.xlu0 0
          %1774 = vperm.xlu0 %1773, %v1656
          %v1775 = vpop.permute.xlu0 %1774
          %1778 = vset.pattern.permute.xlu0 0
          %1779 = vperm.xlu0 %1778, %v1657
          %v1780 = vpop.permute.xlu0 %1779
          %1783 = vset.pattern.permute.xlu0 0
          %1784 = vperm.xlu0 %1783, %v1658
          %v1785 = vpop.permute.xlu0 %1784
          %v1787 = vsub.f32 %v1579, %v1710
          %v1788 = vsub.f32 %v1580, %v1715
          %v1789 = vsub.f32 %v1581, %v1720
          %v1790 = vsub.f32 %v1582, %v1725
          %v1791 = vsub.f32 %v1583, %v1730
          %v1792 = vsub.f32 %v1584, %v1735
          %v1793 = vsub.f32 %v1585, %v1740
          %v1794 = vsub.f32 %v1586, %v1745
          %v1795 = vsub.f32 %v1587, %v1750
          %v1796 = vsub.f32 %v1588, %v1755
          %v1797 = vsub.f32 %v1589, %v1760
          %v1798 = vsub.f32 %v1590, %v1765
          %v1799 = vsub.f32 %v1591, %v1770
          %v1800 = vsub.f32 %v1592, %v1775
          %v1801 = vsub.f32 %v1593, %v1780
          %v1802 = vsub.f32 %v1594, %v1785
          %v1803 = vmul.f32 %v1787, 1.442695
          %v1804 = vpow.pop %v1803
          %v1805 = vmul.f32 %v1788, 1.442695
          %v1806 = vpow.pop %v1805
          %v1807 = vmul.f32 %v1789, 1.442695
          %v1808 = vpow.pop %v1807
          %v1809 = vmul.f32 %v1790, 1.442695
          %v1810 = vpow.pop %v1809
          %v1811 = vmul.f32 %v1791, 1.442695
          %v1812 = vpow.pop %v1811
          %v1813 = vmul.f32 %v1792, 1.442695
          %v1814 = vpow.pop %v1813
          %v1815 = vmul.f32 %v1793, 1.442695
          %v1816 = vpow.pop %v1815
          %v1817 = vmul.f32 %v1794, 1.442695
          %v1818 = vpow.pop %v1817
          %v1819 = vmul.f32 %v1795, 1.442695
          %v1820 = vpow.pop %v1819
          %v1821 = vmul.f32 %v1796, 1.442695
          %v1822 = vpow.pop %v1821
          %v1823 = vmul.f32 %v1797, 1.442695
          %v1824 = vpow.pop %v1823
          %v1825 = vmul.f32 %v1798, 1.442695
          %v1826 = vpow.pop %v1825
          %v1827 = vmul.f32 %v1799, 1.442695
          %v1828 = vpow.pop %v1827
          %v1829 = vmul.f32 %v1800, 1.442695
          %v1830 = vpow.pop %v1829
          %v1831 = vmul.f32 %v1801, 1.442695
          %v1832 = vpow.pop %v1831
          %v1833 = vmul.f32 %v1802, 1.442695
          %v1834 = vpow.pop %v1833
          %v1835 = vld [vmem:[#allocation3] sm:$0xff]
          %v1836 = vld [vmem:[#allocation3 + $0x8] sm:$0xff]
          %v1837 = vld [vmem:[#allocation3 + $0x10] sm:$0xff]
          %v1838 = vld [vmem:[#allocation3 + $0x18] sm:$0xff]
          %v1839 = vld [vmem:[#allocation3 + $0x20] sm:$0xff]
          %v1840 = vld [vmem:[#allocation3 + $0x28] sm:$0xff]
          %v1841 = vld [vmem:[#allocation3 + $0x30] sm:$0xff]
          %v1842 = vld [vmem:[#allocation3 + $0x38] sm:$0xff]
          %v1843 = vld [vmem:[#allocation3 + $0x40] sm:$0xff]
          %v1844 = vld [vmem:[#allocation3 + $0x48] sm:$0xff]
          %v1845 = vld [vmem:[#allocation3 + $0x50] sm:$0xff]
          %v1846 = vld [vmem:[#allocation3 + $0x58] sm:$0xff]
          %v1847 = vld [vmem:[#allocation3 + $0x60] sm:$0xff]
          %v1848 = vld [vmem:[#allocation3 + $0x68] sm:$0xff]
          %v1849 = vld [vmem:[#allocation3 + $0x70] sm:$0xff]
          %v1850 = vld [vmem:[#allocation3 + $0x78] sm:$0xff]
          %v1851 = vmul.f32 %v1676, %v1835
          %v1852 = vmul.f32 %v1678, %v1836
          %v1853 = vmul.f32 %v1680, %v1837
          %v1854 = vmul.f32 %v1682, %v1838
          %v1855 = vmul.f32 %v1684, %v1839
          %v1856 = vmul.f32 %v1686, %v1840
          %v1857 = vmul.f32 %v1688, %v1841
          %v1858 = vmul.f32 %v1690, %v1842
          %v1859 = vmul.f32 %v1692, %v1843
          %v1860 = vmul.f32 %v1694, %v1844
          %v1861 = vmul.f32 %v1696, %v1845
          %v1862 = vmul.f32 %v1698, %v1846
          %v1863 = vmul.f32 %v1700, %v1847
          %v1864 = vmul.f32 %v1702, %v1848
          %v1865 = vmul.f32 %v1704, %v1849
          %v1866 = vmul.f32 %v1706, %v1850
          %1867 = vadd.xlane.f32.xlu0 %v1804
          %v1868 = vpop.xlane.xlu0 %1867
          %1869 = vadd.xlane.f32.xlu0 %v1806
          %v1870 = vpop.xlane.xlu0 %1869
          %1871 = vadd.xlane.f32.xlu0 %v1808
          %v1872 = vpop.xlane.xlu0 %1871
          %1873 = vadd.xlane.f32.xlu0 %v1810
          %v1874 = vpop.xlane.xlu0 %1873
          %1875 = vadd.xlane.f32.xlu0 %v1812
          %v1876 = vpop.xlane.xlu0 %1875
          %1877 = vadd.xlane.f32.xlu0 %v1814
          %v1878 = vpop.xlane.xlu0 %1877
          %1879 = vadd.xlane.f32.xlu0 %v1816
          %v1880 = vpop.xlane.xlu0 %1879
          %1881 = vadd.xlane.f32.xlu0 %v1818
          %v1882 = vpop.xlane.xlu0 %1881
          %1883 = vadd.xlane.f32.xlu0 %v1820
          %v1884 = vpop.xlane.xlu0 %1883
          %1885 = vadd.xlane.f32.xlu0 %v1822
          %v1886 = vpop.xlane.xlu0 %1885
          %1887 = vadd.xlane.f32.xlu0 %v1824
          %v1888 = vpop.xlane.xlu0 %1887
          %1889 = vadd.xlane.f32.xlu0 %v1826
          %v1890 = vpop.xlane.xlu0 %1889
          %1891 = vadd.xlane.f32.xlu0 %v1828
          %v1892 = vpop.xlane.xlu0 %1891
          %1893 = vadd.xlane.f32.xlu0 %v1830
          %v1894 = vpop.xlane.xlu0 %1893
          %1895 = vadd.xlane.f32.xlu0 %v1832
          %v1896 = vpop.xlane.xlu0 %1895
          %1897 = vadd.xlane.f32.xlu0 %v1834
          %v1898 = vpop.xlane.xlu0 %1897
          %v1899 = vadd.f32 %v1851, %v1868
          %v1900 = vadd.f32 %v1852, %v1870
          %v1901 = vadd.f32 %v1853, %v1872
          %v1902 = vadd.f32 %v1854, %v1874
          %v1903 = vadd.f32 %v1855, %v1876
          %v1904 = vadd.f32 %v1856, %v1878
          %v1905 = vadd.f32 %v1857, %v1880
          %v1906 = vadd.f32 %v1858, %v1882
          %v1907 = vadd.f32 %v1859, %v1884
          %v1908 = vadd.f32 %v1860, %v1886
          %v1909 = vadd.f32 %v1861, %v1888
          %v1910 = vadd.f32 %v1862, %v1890
          %v1911 = vadd.f32 %v1863, %v1892
          %v1912 = vadd.f32 %v1864, %v1894
          %v1913 = vadd.f32 %v1865, %v1896
          %v1914 = vadd.f32 %v1866, %v1898
          %1915 = vst.msk [vmem:[#allocation3] sm:$0xff] %vm202, %v1899
          %1916 = vst.msk [vmem:[#allocation3 + $0x8] sm:$0xff] %vm202, %v1900
          %1917 = vst.msk [vmem:[#allocation3 + $0x10] sm:$0xff] %vm202, %v1901
          %1918 = vst.msk [vmem:[#allocation3 + $0x18] sm:$0xff] %vm202, %v1902
          %1919 = vst.msk [vmem:[#allocation3 + $0x20] sm:$0xff] %vm202, %v1903
          %1920 = vst.msk [vmem:[#allocation3 + $0x28] sm:$0xff] %vm202, %v1904
          %1921 = vst.msk [vmem:[#allocation3 + $0x30] sm:$0xff] %vm202, %v1905
          %1922 = vst.msk [vmem:[#allocation3 + $0x38] sm:$0xff] %vm202, %v1906
          %1923 = vst.msk [vmem:[#allocation3 + $0x40] sm:$0xff] %vm202, %v1907
          %1924 = vst.msk [vmem:[#allocation3 + $0x48] sm:$0xff] %vm202, %v1908
          %1925 = vst.msk [vmem:[#allocation3 + $0x50] sm:$0xff] %vm202, %v1909
          %1926 = vst.msk [vmem:[#allocation3 + $0x58] sm:$0xff] %vm202, %v1910
          %1927 = vst.msk [vmem:[#allocation3 + $0x60] sm:$0xff] %vm202, %v1911
          %1928 = vst.msk [vmem:[#allocation3 + $0x68] sm:$0xff] %vm202, %v1912
          %1929 = vst.msk [vmem:[#allocation3 + $0x70] sm:$0xff] %vm202, %v1913
          %1930 = vst.msk [vmem:[#allocation3 + $0x78] sm:$0xff] %vm202, %v1914
          %v1931 = vld [vmem:[#allocation4] sm:$0xff]
          %v1932 = vld [vmem:[#allocation4 + $0x8] sm:$0xff]
          %v1933 = vld [vmem:[#allocation4 + $0x10] sm:$0xff]
          %v1934 = vld [vmem:[#allocation4 + $0x18] sm:$0xff]
          %v1935 = vld [vmem:[#allocation4 + $0x20] sm:$0xff]
          %v1936 = vld [vmem:[#allocation4 + $0x28] sm:$0xff]
          %v1937 = vld [vmem:[#allocation4 + $0x30] sm:$0xff]
          %v1938 = vld [vmem:[#allocation4 + $0x38] sm:$0xff]
          %v1939 = vld [vmem:[#allocation4 + $0x40] sm:$0xff]
          %v1940 = vld [vmem:[#allocation4 + $0x48] sm:$0xff]
          %v1941 = vld [vmem:[#allocation4 + $0x50] sm:$0xff]
          %v1942 = vld [vmem:[#allocation4 + $0x58] sm:$0xff]
          %v1943 = vld [vmem:[#allocation4 + $0x60] sm:$0xff]
          %v1944 = vld [vmem:[#allocation4 + $0x68] sm:$0xff]
          %v1945 = vld [vmem:[#allocation4 + $0x70] sm:$0xff]
          %v1946 = vld [vmem:[#allocation4 + $0x78] sm:$0xff]
          %1948 = vset.pattern.permute.xlu0 0
          %1949 = vperm.xlu0 %1948, %v1676
          %v1950 = vpop.permute.xlu0 %1949
          %1953 = vset.pattern.permute.xlu0 0
          %1954 = vperm.xlu0 %1953, %v1678
          %v1955 = vpop.permute.xlu0 %1954
          %1958 = vset.pattern.permute.xlu0 0
          %1959 = vperm.xlu0 %1958, %v1680
          %v1960 = vpop.permute.xlu0 %1959
          %1963 = vset.pattern.permute.xlu0 0
          %1964 = vperm.xlu0 %1963, %v1682
          %v1965 = vpop.permute.xlu0 %1964
          %1968 = vset.pattern.permute.xlu0 0
          %1969 = vperm.xlu0 %1968, %v1684
          %v1970 = vpop.permute.xlu0 %1969
          %1973 = vset.pattern.permute.xlu0 0
          %1974 = vperm.xlu0 %1973, %v1686
          %v1975 = vpop.permute.xlu0 %1974
          %1978 = vset.pattern.permute.xlu0 0
          %1979 = vperm.xlu0 %1978, %v1688
          %v1980 = vpop.permute.xlu0 %1979
          %1983 = vset.pattern.permute.xlu0 0
          %1984 = vperm.xlu0 %1983, %v1690
          %v1985 = vpop.permute.xlu0 %1984
          %1988 = vset.pattern.permute.xlu0 0
          %1989 = vperm.xlu0 %1988, %v1692
          %v1990 = vpop.permute.xlu0 %1989
          %1993 = vset.pattern.permute.xlu0 0
          %1994 = vperm.xlu0 %1993, %v1694
          %v1995 = vpop.permute.xlu0 %1994
          %1998 = vset.pattern.permute.xlu0 0
          %1999 = vperm.xlu0 %1998, %v1696
          %v2000 = vpop.permute.xlu0 %1999
          %2003 = vset.pattern.permute.xlu0 0
          %2004 = vperm.xlu0 %2003, %v1698
          %v2005 = vpop.permute.xlu0 %2004
          %2008 = vset.pattern.permute.xlu0 0
          %2009 = vperm.xlu0 %2008, %v1700
          %v2010 = vpop.permute.xlu0 %2009
          %2013 = vset.pattern.permute.xlu0 0
          %2014 = vperm.xlu0 %2013, %v1702
          %v2015 = vpop.permute.xlu0 %2014
          %2018 = vset.pattern.permute.xlu0 0
          %2019 = vperm.xlu0 %2018, %v1704
          %v2020 = vpop.permute.xlu0 %2019
          %2023 = vset.pattern.permute.xlu0 0
          %2024 = vperm.xlu0 %2023, %v1706
          %v2025 = vpop.permute.xlu0 %2024
          %v2027 = vmul.f32 %v1950, %v1931
          %v2028 = vmul.f32 %v1955, %v1932
          %v2029 = vmul.f32 %v1960, %v1933
          %v2030 = vmul.f32 %v1965, %v1934
          %v2031 = vmul.f32 %v1970, %v1935
          %v2032 = vmul.f32 %v1975, %v1936
          %v2033 = vmul.f32 %v1980, %v1937
          %v2034 = vmul.f32 %v1985, %v1938
          %v2035 = vmul.f32 %v1990, %v1939
          %v2036 = vmul.f32 %v1995, %v1940
          %v2037 = vmul.f32 %v2000, %v1941
          %v2038 = vmul.f32 %v2005, %v1942
          %v2039 = vmul.f32 %v2010, %v1943
          %v2040 = vmul.f32 %v2015, %v1944
          %v2041 = vmul.f32 %v2020, %v1945
          %v2042 = vmul.f32 %v2025, %v1946
          %2043 = vmatprep.subr.mxu0 0.0
          %2044 = vmatpush1.msra.mxu0 %v1302
          %2045 = vmatprep.subr.mxu0 0.0
          %2046 = vmatpush1.msra.mxu0 %v1307
          %2047 = vmatprep.subr.mxu0 0.0
          %2048 = vmatpush1.msra.mxu0 %v1312
          %2049 = vmatprep.subr.mxu0 0.0
          %2050 = vmatpush1.msra.mxu0 %v1317
          %2051 = vmatprep.subr.mxu0 0.0
          %2052 = vmatpush1.msra.mxu0 %v1322
          %2053 = vmatprep.subr.mxu0 0.0
          %2054 = vmatpush1.msra.mxu0 %v1327
          %2055 = vmatprep.subr.mxu0 0.0
          %2056 = vmatpush1.msra.mxu0 %v1332
          %2057 = vmatprep.subr.mxu0 0.0
          %2058 = vmatpush1.msra.mxu0 %v1337
          %2059 = vmatprep.subr.mxu0 0.0
          %2060 = vmatpush1.msra.mxu0 %v1342
          %2061 = vmatprep.subr.mxu0 0.0
          %2062 = vmatpush1.msra.mxu0 %v1347
          %2063 = vmatprep.subr.mxu0 0.0
          %2064 = vmatpush1.msra.mxu0 %v1352
          %2065 = vmatprep.subr.mxu0 0.0
          %2066 = vmatpush1.msra.mxu0 %v1357
          %2067 = vmatprep.subr.mxu0 0.0
          %2068 = vmatpush1.msra.mxu0 %v1362
          %2069 = vmatprep.subr.mxu0 0.0
          %2070 = vmatpush1.msra.mxu0 %v1367
          %2071 = vmatprep.subr.mxu0 0.0
          %2072 = vmatpush1.msra.mxu0 %v1372
          %2073 = vmatprep.subr.mxu0 0.0
          %2074 = vmatpush1.msra.mxu0 %v1377
          %2075 = vmatprep.subr.mxu0 0.0
          %2076 = vmatpush1.msra.mxu0 0.0
          %2077 = vmatprep.subr.mxu0 0.0
          %2078 = vmatpush1.msra.mxu0 0.0
          %2079 = vmatprep.subr.mxu0 0.0
          %2080 = vmatpush1.msra.mxu0 0.0
          %2081 = vmatprep.subr.mxu0 0.0
          %2082 = vmatpush1.msra.mxu0 0.0
          %2083 = vmatprep.subr.mxu0 0.0
          %2084 = vmatpush1.msra.mxu0 0.0
          %2085 = vmatprep.subr.mxu0 0.0
          %2086 = vmatpush1.msra.mxu0 0.0
          %2087 = vmatprep.subr.mxu0 0.0
          %2088 = vmatpush1.msra.mxu0 0.0
          %2089 = vmatprep.subr.mxu0 0.0
          %2090 = vmatpush1.msra.mxu0 0.0
          %2091 = vmatprep.subr.mxu0 0.0
          %2092 = vmatpush1.msra.mxu0 0.0
          %2093 = vmatprep.subr.mxu0 0.0
          %2094 = vmatpush1.msra.mxu0 0.0
          %2095 = vmatprep.subr.mxu0 0.0
          %2096 = vmatpush1.msra.mxu0 0.0
          %2097 = vmatprep.subr.mxu0 0.0
          %2098 = vmatpush1.msra.mxu0 0.0
          %2099 = vmatprep.subr.mxu0 0.0
          %2100 = vmatpush1.msra.mxu0 0.0
          %2101 = vmatprep.subr.mxu0 0.0
          %2102 = vmatpush1.msra.mxu0 0.0
          %2103 = vmatprep.subr.mxu0 0.0
          %2104 = vmatpush1.msra.mxu0 0.0
          %2105 = vmatprep.subr.mxu0 0.0
          %2106 = vmatpush1.msra.mxu0 0.0
          %2107 = vmatprep.mubr.f32.mxu0 0.0
          %2108 = vmatmul.mubr.f32.gmra.mrb[0].mxu0 %v1804
          %v2109 = vpop.f32.mrb[0].mxu0
          %v2110 = vadd.f32 0.0, %v2109
          %v2111 = vpop.f32.mrb[0].mxu0
          %2112 = vmatprep.mubr.f32.mxu0 0.0
          %2113 = vmatmul.mubr.f32.gmra.mrb[0].mxu0 %v1806
          %v2114 = vpop.f32.mrb[0].mxu0
          %v2115 = vadd.f32 0.0, %v2114
          %v2116 = vpop.f32.mrb[0].mxu0
          %2117 = vmatprep.mubr.f32.mxu0 0.0
          %2118 = vmatmul.mubr.f32.gmra.mrb[0].mxu0 %v1808
          %v2119 = vpop.f32.mrb[0].mxu0
          %v2120 = vadd.f32 0.0, %v2119
          %v2121 = vpop.f32.mrb[0].mxu0
          %2122 = vmatprep.mubr.f32.mxu0 0.0
          %2123 = vmatmul.mubr.f32.gmra.mrb[0].mxu0 %v1810
          %v2124 = vpop.f32.mrb[0].mxu0
          %v2125 = vadd.f32 0.0, %v2124
          %v2126 = vpop.f32.mrb[0].mxu0
          %2127 = vmatprep.mubr.f32.mxu0 0.0
          %2128 = vmatmul.mubr.f32.gmra.mrb[0].mxu0 %v1812
          %v2129 = vpop.f32.mrb[0].mxu0
          %v2130 = vadd.f32 0.0, %v2129
          %v2131 = vpop.f32.mrb[0].mxu0
          %2132 = vmatprep.mubr.f32.mxu0 0.0
          %2133 = vmatmul.mubr.f32.gmra.mrb[0].mxu0 %v1814
          %v2134 = vpop.f32.mrb[0].mxu0
          %v2135 = vadd.f32 0.0, %v2134
          %v2136 = vpop.f32.mrb[0].mxu0
          %2137 = vmatprep.mubr.f32.mxu0 0.0
          %2138 = vmatmul.mubr.f32.gmra.mrb[0].mxu0 %v1816
          %v2139 = vpop.f32.mrb[0].mxu0
          %v2140 = vadd.f32 0.0, %v2139
          %v2141 = vpop.f32.mrb[0].mxu0
          %2142 = vmatprep.mubr.f32.mxu0 0.0
          %2143 = vmatmul.mubr.f32.gmra.mrb[0].mxu0 %v1818
          %v2144 = vpop.f32.mrb[0].mxu0
          %v2145 = vadd.f32 0.0, %v2144
          %v2146 = vpop.f32.mrb[0].mxu0
          %2147 = vmatprep.mubr.f32.mxu0 0.0
          %2148 = vmatmul.mubr.f32.gmra.mrb[0].mxu0 %v1820
          %v2149 = vpop.f32.mrb[0].mxu0
          %v2150 = vadd.f32 0.0, %v2149
          %v2151 = vpop.f32.mrb[0].mxu0
          %2152 = vmatprep.mubr.f32.mxu0 0.0
          %2153 = vmatmul.mubr.f32.gmra.mrb[0].mxu0 %v1822
          %v2154 = vpop.f32.mrb[0].mxu0
          %v2155 = vadd.f32 0.0, %v2154
          %v2156 = vpop.f32.mrb[0].mxu0
          %2157 = vmatprep.mubr.f32.mxu0 0.0
          %2158 = vmatmul.mubr.f32.gmra.mrb[0].mxu0 %v1824
          %v2159 = vpop.f32.mrb[0].mxu0
          %v2160 = vadd.f32 0.0, %v2159
          %v2161 = vpop.f32.mrb[0].mxu0
          %2162 = vmatprep.mubr.f32.mxu0 0.0
          %2163 = vmatmul.mubr.f32.gmra.mrb[0].mxu0 %v1826
          %v2164 = vpop.f32.mrb[0].mxu0
          %v2165 = vadd.f32 0.0, %v2164
          %v2166 = vpop.f32.mrb[0].mxu0
          %2167 = vmatprep.mubr.f32.mxu0 0.0
          %2168 = vmatmul.mubr.f32.gmra.mrb[0].mxu0 %v1828
          %v2169 = vpop.f32.mrb[0].mxu0
          %v2170 = vadd.f32 0.0, %v2169
          %v2171 = vpop.f32.mrb[0].mxu0
          %2172 = vmatprep.mubr.f32.mxu0 0.0
          %2173 = vmatmul.mubr.f32.gmra.mrb[0].mxu0 %v1830
          %v2174 = vpop.f32.mrb[0].mxu0
          %v2175 = vadd.f32 0.0, %v2174
          %v2176 = vpop.f32.mrb[0].mxu0
          %2177 = vmatprep.mubr.f32.mxu0 0.0
          %2178 = vmatmul.mubr.f32.gmra.mrb[0].mxu0 %v1832
          %v2179 = vpop.f32.mrb[0].mxu0
          %v2180 = vadd.f32 0.0, %v2179
          %v2181 = vpop.f32.mrb[0].mxu0
          %2182 = vmatprep.mubr.f32.mxu0 0.0
          %2183 = vmatmul.mubr.f32.gmra.mrb[0].mxu0 %v1834
          %v2184 = vpop.f32.mrb[0].mxu0
          %v2185 = vadd.f32 0.0, %v2184
          %v2186 = vpop.f32.mrb[0].mxu0
          %2187 = vdwg.mxu0
          %v2188 = vadd.f32 %v2027, %v2110
          %v2189 = vadd.f32 %v2028, %v2115
          %v2190 = vadd.f32 %v2029, %v2120
          %v2191 = vadd.f32 %v2030, %v2125
          %v2192 = vadd.f32 %v2031, %v2130
          %v2193 = vadd.f32 %v2032, %v2135
          %v2194 = vadd.f32 %v2033, %v2140
          %v2195 = vadd.f32 %v2034, %v2145
          %v2196 = vadd.f32 %v2035, %v2150
          %v2197 = vadd.f32 %v2036, %v2155
          %v2198 = vadd.f32 %v2037, %v2160
          %v2199 = vadd.f32 %v2038, %v2165
          %v2200 = vadd.f32 %v2039, %v2170
          %v2201 = vadd.f32 %v2040, %v2175
          %v2202 = vadd.f32 %v2041, %v2180
          %v2203 = vadd.f32 %v2042, %v2185
          %2204 = vst [vmem:[#allocation4] sm:$0xff] %v2188
          %2205 = vst [vmem:[#allocation4 + $0x8] sm:$0xff] %v2189
          %2206 = vst [vmem:[#allocation4 + $0x10] sm:$0xff] %v2190
          %2207 = vst [vmem:[#allocation4 + $0x18] sm:$0xff] %v2191
          %2208 = vst [vmem:[#allocation4 + $0x20] sm:$0xff] %v2192
          %2209 = vst [vmem:[#allocation4 + $0x28] sm:$0xff] %v2193
          %2210 = vst [vmem:[#allocation4 + $0x30] sm:$0xff] %v2194
          %2211 = vst [vmem:[#allocation4 + $0x38] sm:$0xff] %v2195
          %2212 = vst [vmem:[#allocation4 + $0x40] sm:$0xff] %v2196
          %2213 = vst [vmem:[#allocation4 + $0x48] sm:$0xff] %v2197
          %2214 = vst [vmem:[#allocation4 + $0x50] sm:$0xff] %v2198
          %2215 = vst [vmem:[#allocation4 + $0x58] sm:$0xff] %v2199
          %2216 = vst [vmem:[#allocation4 + $0x60] sm:$0xff] %v2200
          %2217 = vst [vmem:[#allocation4 + $0x68] sm:$0xff] %v2201
          %2218 = vst [vmem:[#allocation4 + $0x70] sm:$0xff] %v2202
          %2219 = vst [vmem:[#allocation4 + $0x78] sm:$0xff] %v2203
          %2220 = vst.msk [vmem:[#allocation2] sm:$0xff] %vm202, %v1643
          %2221 = vst.msk [vmem:[#allocation2 + $0x8] sm:$0xff] %vm202, %v1644
          %2222 = vst.msk [vmem:[#allocation2 + $0x10] sm:$0xff] %vm202, %v1645
          %2223 = vst.msk [vmem:[#allocation2 + $0x18] sm:$0xff] %vm202, %v1646
          %2224 = vst.msk [vmem:[#allocation2 + $0x20] sm:$0xff] %vm202, %v1647
          %2225 = vst.msk [vmem:[#allocation2 + $0x28] sm:$0xff] %vm202, %v1648
          %2226 = vst.msk [vmem:[#allocation2 + $0x30] sm:$0xff] %vm202, %v1649
          %2227 = vst.msk [vmem:[#allocation2 + $0x38] sm:$0xff] %vm202, %v1650
          %2228 = vst.msk [vmem:[#allocation2 + $0x40] sm:$0xff] %vm202, %v1651
          %2229 = vst.msk [vmem:[#allocation2 + $0x48] sm:$0xff] %vm202, %v1652
          %2230 = vst.msk [vmem:[#allocation2 + $0x50] sm:$0xff] %vm202, %v1653
          %2231 = vst.msk [vmem:[#allocation2 + $0x58] sm:$0xff] %vm202, %v1654
          %2232 = vst.msk [vmem:[#allocation2 + $0x60] sm:$0xff] %vm202, %v1655
          %2233 = vst.msk [vmem:[#allocation2 + $0x68] sm:$0xff] %vm202, %v1656
          %2234 = vst.msk [vmem:[#allocation2 + $0x70] sm:$0xff] %vm202, %v1657
          %2235 = vst.msk [vmem:[#allocation2 + $0x78] sm:$0xff] %vm202, %v1658
        $region41: #{head_forward.1} parent=27 // loop_footer
          %s647 = sadd.s32 %s645, 1
        $region42: #{head_forward.1} parent=27 // loop_footer_branch
          %644 = sbr.rel target = $region38
        $region43: #{head_forward.1} parent=27 // loop_exit
          _
        %v2236 = vld [vmem:[#allocation4] sm:$0xff]
        %v2237 = vld [vmem:[#allocation4 + $0x8] sm:$0xff]
        %v2238 = vld [vmem:[#allocation4 + $0x10] sm:$0xff]
        %v2239 = vld [vmem:[#allocation4 + $0x18] sm:$0xff]
        %v2240 = vld [vmem:[#allocation4 + $0x20] sm:$0xff]
        %v2241 = vld [vmem:[#allocation4 + $0x28] sm:$0xff]
        %v2242 = vld [vmem:[#allocation4 + $0x30] sm:$0xff]
        %v2243 = vld [vmem:[#allocation4 + $0x38] sm:$0xff]
        %v2244 = vld [vmem:[#allocation4 + $0x40] sm:$0xff]
        %v2245 = vld [vmem:[#allocation4 + $0x48] sm:$0xff]
        %v2246 = vld [vmem:[#allocation4 + $0x50] sm:$0xff]
        %v2247 = vld [vmem:[#allocation4 + $0x58] sm:$0xff]
        %v2248 = vld [vmem:[#allocation4 + $0x60] sm:$0xff]
        %v2249 = vld [vmem:[#allocation4 + $0x68] sm:$0xff]
        %v2250 = vld [vmem:[#allocation4 + $0x70] sm:$0xff]
        %v2251 = vld [vmem:[#allocation4 + $0x78] sm:$0xff]
        %v2252 = vld [vmem:[#allocation3] sm:$0xff]
        %v2253 = vld [vmem:[#allocation3 + $0x8] sm:$0xff]
        %v2254 = vld [vmem:[#allocation3 + $0x10] sm:$0xff]
        %v2255 = vld [vmem:[#allocation3 + $0x18] sm:$0xff]
        %v2256 = vld [vmem:[#allocation3 + $0x20] sm:$0xff]
        %v2257 = vld [vmem:[#allocation3 + $0x28] sm:$0xff]
        %v2258 = vld [vmem:[#allocation3 + $0x30] sm:$0xff]
        %v2259 = vld [vmem:[#allocation3 + $0x38] sm:$0xff]
        %v2260 = vld [vmem:[#allocation3 + $0x40] sm:$0xff]
        %v2261 = vld [vmem:[#allocation3 + $0x48] sm:$0xff]
        %v2262 = vld [vmem:[#allocation3 + $0x50] sm:$0xff]
        %v2263 = vld [vmem:[#allocation3 + $0x58] sm:$0xff]
        %v2264 = vld [vmem:[#allocation3 + $0x60] sm:$0xff]
        %v2265 = vld [vmem:[#allocation3 + $0x68] sm:$0xff]
        %v2266 = vld [vmem:[#allocation3 + $0x70] sm:$0xff]
        %v2267 = vld [vmem:[#allocation3 + $0x78] sm:$0xff]
        %2269 = vset.pattern.permute.xlu0 0
        %2270 = vperm.xlu0 %2269, %v2252
        %v2271 = vpop.permute.xlu0 %2270
        %2274 = vset.pattern.permute.xlu0 0
        %2275 = vperm.xlu0 %2274, %v2253
        %v2276 = vpop.permute.xlu0 %2275
        %2279 = vset.pattern.permute.xlu0 0
        %2280 = vperm.xlu0 %2279, %v2254
        %v2281 = vpop.permute.xlu0 %2280
        %2284 = vset.pattern.permute.xlu0 0
        %2285 = vperm.xlu0 %2284, %v2255
        %v2286 = vpop.permute.xlu0 %2285
        %2289 = vset.pattern.permute.xlu0 0
        %2290 = vperm.xlu0 %2289, %v2256
        %v2291 = vpop.permute.xlu0 %2290
        %2294 = vset.pattern.permute.xlu0 0
        %2295 = vperm.xlu0 %2294, %v2257
        %v2296 = vpop.permute.xlu0 %2295
        %2299 = vset.pattern.permute.xlu0 0
        %2300 = vperm.xlu0 %2299, %v2258
        %v2301 = vpop.permute.xlu0 %2300
        %2304 = vset.pattern.permute.xlu0 0
        %2305 = vperm.xlu0 %2304, %v2259
        %v2306 = vpop.permute.xlu0 %2305
        %2309 = vset.pattern.permute.xlu0 0
        %2310 = vperm.xlu0 %2309, %v2260
        %v2311 = vpop.permute.xlu0 %2310
        %2314 = vset.pattern.permute.xlu0 0
        %2315 = vperm.xlu0 %2314, %v2261
        %v2316 = vpop.permute.xlu0 %2315
        %2319 = vset.pattern.permute.xlu0 0
        %2320 = vperm.xlu0 %2319, %v2262
        %v2321 = vpop.permute.xlu0 %2320
        %2324 = vset.pattern.permute.xlu0 0
        %2325 = vperm.xlu0 %2324, %v2263
        %v2326 = vpop.permute.xlu0 %2325
        %2329 = vset.pattern.permute.xlu0 0
        %2330 = vperm.xlu0 %2329, %v2264
        %v2331 = vpop.permute.xlu0 %2330
        %2334 = vset.pattern.permute.xlu0 0
        %2335 = vperm.xlu0 %2334, %v2265
        %v2336 = vpop.permute.xlu0 %2335
        %2339 = vset.pattern.permute.xlu0 0
        %2340 = vperm.xlu0 %2339, %v2266
        %v2341 = vpop.permute.xlu0 %2340
        %2344 = vset.pattern.permute.xlu0 0
        %2345 = vperm.xlu0 %2344, %v2267
        %v2346 = vpop.permute.xlu0 %2345
        %v2348 = vrcp.pop %v2271
        %v2349 = vmul.f32 %v2236, %v2348
        %v2350 = vrcp.pop %v2276
        %v2351 = vmul.f32 %v2237, %v2350
        %v2352 = vrcp.pop %v2281
        %v2353 = vmul.f32 %v2238, %v2352
        %v2354 = vrcp.pop %v2286
        %v2355 = vmul.f32 %v2239, %v2354
        %v2356 = vrcp.pop %v2291
        %v2357 = vmul.f32 %v2240, %v2356
        %v2358 = vrcp.pop %v2296
        %v2359 = vmul.f32 %v2241, %v2358
        %v2360 = vrcp.pop %v2301
        %v2361 = vmul.f32 %v2242, %v2360
        %v2362 = vrcp.pop %v2306
        %v2363 = vmul.f32 %v2243, %v2362
        %v2364 = vrcp.pop %v2311
        %v2365 = vmul.f32 %v2244, %v2364
        %v2366 = vrcp.pop %v2316
        %v2367 = vmul.f32 %v2245, %v2366
        %v2368 = vrcp.pop %v2321
        %v2369 = vmul.f32 %v2246, %v2368
        %v2370 = vrcp.pop %v2326
        %v2371 = vmul.f32 %v2247, %v2370
        %v2372 = vrcp.pop %v2331
        %v2373 = vmul.f32 %v2248, %v2372
        %v2374 = vrcp.pop %v2336
        %v2375 = vmul.f32 %v2249, %v2374
        %v2376 = vrcp.pop %v2341
        %v2377 = vmul.f32 %v2250, %v2376
        %v2378 = vrcp.pop %v2346
        %v2379 = vmul.f32 %v2251, %v2378
        %vm2380 = vcmask 523264
        %2381 = vst.msk [vmem:[%s200] sm:$0xff] %vm2380, %v2349
        %2382 = vst.msk [vmem:[%s200 + $0x8] sm:$0xff] %vm2380, %v2351
        %2383 = vst.msk [vmem:[%s200 + $0x10] sm:$0xff] %vm2380, %v2353
        %2384 = vst.msk [vmem:[%s200 + $0x18] sm:$0xff] %vm2380, %v2355
        %2385 = vst.msk [vmem:[%s200 + $0x20] sm:$0xff] %vm2380, %v2357
        %2386 = vst.msk [vmem:[%s200 + $0x28] sm:$0xff] %vm2380, %v2359
        %2387 = vst.msk [vmem:[%s200 + $0x30] sm:$0xff] %vm2380, %v2361
        %2388 = vst.msk [vmem:[%s200 + $0x38] sm:$0xff] %vm2380, %v2363
        %2389 = vst.msk [vmem:[%s200 + $0x40] sm:$0xff] %vm2380, %v2365
        %2390 = vst.msk [vmem:[%s200 + $0x48] sm:$0xff] %vm2380, %v2367
        %2391 = vst.msk [vmem:[%s200 + $0x50] sm:$0xff] %vm2380, %v2369
        %2392 = vst.msk [vmem:[%s200 + $0x58] sm:$0xff] %vm2380, %v2371
        %2393 = vst.msk [vmem:[%s200 + $0x60] sm:$0xff] %vm2380, %v2373
        %2394 = vst.msk [vmem:[%s200 + $0x68] sm:$0xff] %vm2380, %v2375
        %2395 = vst.msk [vmem:[%s200 + $0x70] sm:$0xff] %vm2380, %v2377
        %2396 = vst.msk [vmem:[%s200 + $0x78] sm:$0xff] %vm2380, %v2379
        %s2397 = smul.u32 16, %s22
        %p2398 = scmp.lt.s32.totalorder %s21, 1
        %s2399 = scalar_select %p2398, %s21, 1
        %p2400 = scmp.lt.s32.totalorder %s2397, 15
        %s2401 = scalar_select %p2400, %s2397, 15
        %s2402 = smul.addr %s2399, 16
        %s2403 = sadd.s32 %s2401, %s2402
        %s2404 = smul.addr %s2403, 8
        %s2405 = scalar_lea.vmem %s2, %s2404
        // Predicated region
        $region44: #{head_forward.1} parent=27 // pred_check
          %p2406 = pneg %p96
        $region45: #{head_forward.1} parent=27 // pred_check_branch
          %2408 = sbr.rel (%p2406) target = $region47
        $region46: #{head_forward.1} parent=27 // pred_region
          %s2409 = smul.u32 16, %s22
        $region47: #{head_forward.1} parent=27 // pred_fallthru
          _
      $region28: #{head_forward.1} parent=5 // pred_fallthru
        _
      %p2410 = scmp.le.s32.totalorder 2, %s12
      // Predicated region
      $region48: #{head_forward.1} parent=5 // pred_check
        %p2411 = pneg %p2410
      $region49: #{head_forward.1} parent=5 // pred_check_branch
        %2413 = sbr.rel (%p2411) target = $region51
      $region50: #{head_forward.1} parent=5 // pred_region
        %s2414 = ssub.s32 %s12, 2
        // Predicated region
        $region52: #{head_forward.1} parent=50 // pred_check
          %p2415 = pneg %p102
        $region53: #{head_forward.1} parent=50 // pred_check_branch
          %2417 = sbr.rel (%p2415) target = $region55
        $region54: #{head_forward.1} parent=50 // pred_region
          %s2418 = smul.u32 16, %s24
          %p2419 = scmp.lt.s32.totalorder %s23, 1
          %s2420 = scalar_select %p2419, %s23, 1
          %p2421 = scmp.lt.s32.totalorder %s2418, 15
          %s2422 = scalar_select %p2421, %s2418, 15
          %s2423 = smul.addr %s2420, 16
          %s2424 = sadd.s32 %s2422, %s2423
          %s2425 = smul.addr %s2424, 8
          %s2426 = scalar_lea.vmem %s2, %s2425
        $region55: #{head_forward.1} parent=50 // pred_fallthru
          _
      $region51: #{head_forward.1} parent=5 // pred_fallthru
        _
    $region6: #{head_forward.1} parent=1 // loop_footer
      %s16 = sadd.s32 1, %s12
    $region7: #{head_forward.1} parent=1 // loop_footer_branch
      %11 = sbr.rel target = $region3
    $region8: #{head_forward.1} parent=1 // loop_exit
      _
    %2427 = vsyncpa [#allocation6], 1
    %s2428 = scalar_lea.sflag [#allocation6], 1
    %2429 = vsyncpa %s2428, 1
    %2430 = vsyncpa [#allocation8], 1

</llo_original>
